<compile_context>
chip_gen: v6e
topology: v6e:2x2x1
jax: 0.10.0
libtpu: 0.0.40
codegen_flags: <defaults>
</compile_context>

<pallas_src>
import jax
import jax.numpy as jnp
from jax.experimental import pallas as pl
from jax.experimental.pallas import tpu as pltpu

BN_EPS = 1e-5

# VMEM budget used for tile sizing.  48 MiB scoped limit fits v7x (64 MiB
# physical VMEM) and is well under v5e/v6e (128 MiB); the pipeline budget
# leaves headroom for Mosaic-internal scratch.
_VMEM_LIMIT_BYTES = 48 * 1024 * 1024
_PIPE_BUDGET_BYTES = 36 * 1024 * 1024
_MAX_LANE_TILE = 8192  # big lane-dense slabs amortize the ~0.35us/step overhead


def _round_up(x, m):
    return (x + m - 1) // m * m


def _pad_granule(v):
    # Memory-bound regime: pad only to the bf16 sublane granule (16).  Pad to
    # 128 once the dim is large enough that the zero padding is noise and the
    # kernel flips toward MXU-bound.
    return _round_up(v, 128) if v >= 1024 else _round_up(v, 16)


# ---------------------------------------------------------------------------
# Pass 1: conv (matmul over im2col patches) + BN statistics accumulated in a
# VMEM-resident output block (flushed once per batch).
# ---------------------------------------------------------------------------
def conv_stats_kernel(w_ref, p_ref, conv_ref, stat_ref):
    # w_ref:    (Cout_p, Kp)      bf16 conv weights, resident across the grid
    # p_ref:    (Kp, TILE_S)      bf16 im2col patch tile for (batch n, tile m)
    # conv_ref: (Cout_p, TILE_S)  bf16 raw conv output tile
    # stat_ref: (Cout_p, 2)       f32 [sum, sumsq]; block index is independent
    #                             of the spatial-tile axis, so it stays in VMEM
    #                             across tiles and is written back once/batch.
    conv = jnp.dot(w_ref[...], p_ref[...], preferred_element_type=jnp.float32)
    conv_ref[...] = conv.astype(conv_ref.dtype)

    s = jnp.sum(conv, axis=1, keepdims=True)
    sq = jnp.sum(conv * conv, axis=1, keepdims=True)
    tile_stats = jnp.concatenate([s, sq], axis=1)  # (Cout_p, 2), f32

    m = pl.program_id(1)

    @pl.when(m == 0)
    def _():
        stat_ref[...] = tile_stats

    @pl.when(m > 0)
    def _():
        stat_ref[...] += tile_stats


# ---------------------------------------------------------------------------
# Pass 2: y = relu(conv * scale + shift)  -- one FMA + max per element.
# ---------------------------------------------------------------------------
def bn_relu_kernel(scale_ref, shift_ref, conv_ref, out_ref):
    y = conv_ref[...].astype(jnp.float32) * scale_ref[...] + shift_ref[...]
    out_ref[...] = jnp.maximum(y, 0.0).astype(out_ref.dtype)


def _im2col_3d_s2p1(x):
    """x: (N, Cin, D, H, W) -> patches (N, Cin*27, Do*Ho*Wo) for k=3, s=2, p=1."""
    N, Cin, D, H, W = x.shape
    Do = (D + 2 - 3) // 2 + 1
    Ho = (H + 2 - 3) // 2 + 1
    Wo = (W + 2 - 3) // 2 + 1
    xp = jnp.pad(x, ((0, 0), (0, 0), (1, 1), (1, 1), (1, 1)))
    cols = []
    for kd in range(3):
        for kh in range(3):
            for kw in range(3):
                cols.append(
                    xp[:, :, kd:kd + 2 * Do:2, kh:kh + 2 * Ho:2, kw:kw + 2 * Wo:2]
                )
    # Stack directly in (N, Cin, 27, Do, Ho, Wo) order -> free reshape.
    patches = jnp.stack(cols, axis=2).reshape(N, Cin * 27, Do * Ho * Wo)
    return patches, (Do, Ho, Wo)


def basic_block_forward(x, conv_w, conv_b, bn_gamma, bn_beta):
    """x: (N, Cin, D, H, W) f32; conv_w: (Cout, Cin, 3, 3, 3); returns NCDHW f32."""
    del conv_b  # exact no-op: training-mode BN mean subtraction cancels the bias
    N, Cin, D, H, W = x.shape
    Cout = conv_w.shape[0]

    # TODO(synk): move im2col fully into pass 1 (halo-tiled manual DMA of the
    # padded input with memory_space=pl.ANY) to remove the remaining patches
    # materialization; bf16 + allow_input_fusion only halves that traffic.
    patches, (Do, Ho, Wo) = _im2col_3d_s2p1(x.astype(jnp.bfloat16))
    K = Cin * 27
    S = Do * Ho * Wo

    Kp = _pad_granule(K)
    Cout_p = _pad_granule(Cout)

    # ---- pass-1 tile sizing: count EVERY double-buffered buffer -------------
    # 2x bf16 patches tile (Kp x t) + 2x bf16 conv tile (Cout_p x t), plus the
    # (revisited, but budgeted 2x) bf16 weights and the tiny f32 stats block.
    per_col = 2 * 2 * (Kp + Cout_p)
    fixed = 2 * 2 * Cout_p * Kp + 2 * 4 * Cout_p * 2 + (256 << 10)
    avail = max(0, _PIPE_BUDGET_BYTES - fixed)
    tile_s = avail // per_col
    tile_s = max(128, min(_MAX_LANE_TILE, (tile_s // 128) * 128))
    tile_s = min(tile_s, _round_up(S, 128))
    Sp = _round_up(S, tile_s)
    n_tiles = Sp // tile_s

    # ---- pass-2 tile: no K-sized buffer, so use a larger spatial slab -------
    # 2x bf16 conv-in tile + 2x f32 out tile = 12 bytes per (channel, column).
    t2_cap = max(tile_s, ((_PIPE_BUDGET_BYTES // (12 * Cout_p)) // 128) * 128)
    m2 = 1
    for cand in range(min(8, max(1, t2_cap // tile_s)), 0, -1):
        if n_tiles % cand == 0:
            m2 = cand
            break
    tile2 = tile_s * m2
    n_tiles2 = Sp // tile2

    # ---- pad operands to the chosen granules ---------------------------------
    if (Kp, Sp) != (K, S):
        patches = jnp.pad(patches, ((0, 0), (0, Kp - K), (0, Sp - S)))
    w2 = conv_w.reshape(Cout, K).astype(jnp.bfloat16)
    if (Cout_p, Kp) != (Cout, K):
        w2 = jnp.pad(w2, ((0, Cout_p - Cout), (0, Kp - K)))
    gamma = jnp.pad(bn_gamma, (0, Cout_p - Cout)).reshape(Cout_p, 1)
    beta = jnp.pad(bn_beta, (0, Cout_p - Cout)).reshape(Cout_p, 1)

    # ---- pass 1: conv + BN-stats accumulation ---------------------------------
    # Batch axis "parallel" (megacore), spatial-tile axis "arbitrary" so the
    # stats block can accumulate in VMEM across tiles.
    conv_raw, stats = pl.pallas_call(
        conv_stats_kernel,
        grid=(N, n_tiles),
        in_specs=[
            pl.BlockSpec((Cout_p, Kp), lambda n, m: (0, 0)),             # weights
            pl.BlockSpec((None, Kp, tile_s), lambda n, m: (n, 0, m)),    # patches
        ],
        out_specs=(
            pl.BlockSpec((None, Cout_p, tile_s), lambda n, m: (n, 0, m)),
            pl.BlockSpec((None, Cout_p, 2), lambda n, m: (n, 0, 0)),     # stats
        ),
        out_shape=(
            jax.ShapeDtypeStruct((N, Cout_p, Sp), jnp.bfloat16),
            jax.ShapeDtypeStruct((N, Cout_p, 2), jnp.float32),
        ),
        compiler_params=pltpu.CompilerParams(
            dimension_semantics=("parallel", "arbitrary"),
            vmem_limit_bytes=_VMEM_LIMIT_BYTES,
            allow_input_fusion=[False, True],
        ),
    )(w2, patches)

    # ---- tiny per-channel finalize (plain JAX, O(Cout) work) ------------------
    # Padded K rows / spatial columns / Cout rows are all zero -> they add 0 to
    # the sums, so dividing by the true count is exact.
    count = jnp.float32(N * S)
    tot = stats.sum(axis=0)                                   # (Cout_p, 2)
    mean = tot[:, 0:1] / count
    var = jnp.maximum(tot[:, 1:2] / count - mean * mean, 0.0)  # biased batch var
    scale = gamma * jax.lax.rsqrt(var + BN_EPS)
    shift = beta - mean * scale

    # ---- pass 2: normalize + ReLU, embarrassingly parallel, bigger tiles ------
    out = pl.pallas_call(
        bn_relu_kernel,
        grid=(N, n_tiles2),
        in_specs=[
            pl.BlockSpec((Cout_p, 1), lambda n, m: (0, 0)),
            pl.BlockSpec((Cout_p, 1), lambda n, m: (0, 0)),
            pl.BlockSpec((None, Cout_p, tile2), lambda n, m: (n, 0, m)),
        ],
        out_specs=pl.BlockSpec((None, Cout_p, tile2), lambda n, m: (n, 0, m)),
        out_shape=jax.ShapeDtypeStruct((N, Cout_p, Sp), jnp.float32),
        compiler_params=pltpu.CompilerParams(
            dimension_semantics=("parallel", "parallel"),
            vmem_limit_bytes=_VMEM_LIMIT_BYTES,
        ),
    )(scale, shift, conv_raw)

    # Output is already channel-major per batch -> free reshape, no transpose.
    return out[:, :Cout, :S].reshape(N, Cout, Do, Ho, Wo)


def _reference(x, conv_w, conv_b, bn_gamma, bn_beta):
    """Pure-JAX reference matching PyTorch BasicBlock.forward (training-mode BN)."""
    conv = jax.lax.conv_general_dilated(
        x, conv_w,
        window_strides=(2, 2, 2),
        padding=((1, 1), (1, 1), (1, 1)),
        dimension_numbers=("NCDHW", "OIDHW", "NCDHW"),
    )
    conv = conv + conv_b.reshape(1, -1, 1, 1, 1)
    mean = conv.mean(axis=(0, 2, 3, 4), keepdims=True)
    var = ((conv - mean) ** 2).mean(axis=(0, 2, 3, 4), keepdims=True)  # biased
    y = (conv - mean) * jax.lax.rsqrt(var + BN_EPS)
    y = y * bn_gamma.reshape(1, -1, 1, 1, 1) + bn_beta.reshape(1, -1, 1, 1, 1)
    return jnp.maximum(y, 0.0)


if __name__ == "__main__":
    key = jax.random.PRNGKey(0)
    k_x, k_w, k_b, k_g, k_be = jax.random.split(key, 5)

    N, Cin, D, H, W = 2, 4, 16, 16, 16
    Cout = Cin * 2

    x = jax.random.normal(k_x, (N, Cin, D, H, W), dtype=jnp.float32)
    # deterministic synthetic parameters (shapes per nn.Conv3d / nn.BatchNorm3d)
    conv_w = 0.1 * jax.random.normal(k_w, (Cout, Cin, 3, 3, 3), dtype=jnp.float32)
    conv_b = 0.1 * jax.random.normal(k_b, (Cout,), dtype=jnp.float32)
    bn_gamma = 1.0 + 0.1 * jax.random.normal(k_g, (Cout,), dtype=jnp.float32)
    bn_beta = 0.1 * jax.random.normal(k_be, (Cout,), dtype=jnp.float32)

    fwd = jax.jit(basic_block_forward)
    out = jax.block_until_ready(fwd(x, conv_w, conv_b, bn_gamma, bn_beta))

    ref = _reference(x, conv_w, conv_b, bn_gamma, bn_beta)
    assert out.shape == (N, Cout, D // 2, H // 2, W // 2), out.shape
    # bf16 patches/weights/intermediate -> relaxed tolerance vs the f32 reference.
    assert jnp.allclose(out, ref, atol=2e-2, rtol=2e-2), (
        float(jnp.max(jnp.abs(out - ref)))
    )
    print("KERNEL_OK")
</pallas_src>

<mosaic_0001>
module attributes {stable_mosaic.version = 11 : i64} {
  func.func @conv_stats_kernel(%arg0: i32, %arg1: i32, %arg2: memref<16x112xbf16, #tpu.memory_space<vmem>>, %arg3: memref<1x112x512xbf16, #tpu.memory_space<vmem>>, %arg4: memref<1x16x512xbf16, #tpu.memory_space<vmem>>, %arg5: memref<1x16x2xf32, #tpu.memory_space<vmem>>) attributes {dimension_semantics = [#tpu.dimension_semantics<parallel>, #tpu.dimension_semantics<arbitrary>], iteration_bounds = array<i64: 2, 1>, scalar_prefetch = 0 : i64, scratch_operands = 0 : i64, tpu.core_type = #tpu.core_type<tc>, window_params = [{pipeline_mode = #tpu.pipeline_mode<synchronous>, transform_indices = @transform_0, window_bounds = array<i64: 16, 112>}, {transform_indices = @transform_1, window_bounds = array<i64: 1, 112, 512>}, {transform_indices = @transform_2, window_bounds = array<i64: 1, 16, 512>}, {transform_indices = @transform_3, window_bounds = array<i64: 1, 16, 2>}]} {
    %c0 = arith.constant 0 : index
    %c0_0 = arith.constant 0 : index
    %0 = vector.load %arg2[%c0, %c0_0] : memref<16x112xbf16, #tpu.memory_space<vmem>>, vector<16x112xbf16>
    %c0_1 = arith.constant 0 : index
    %c0_2 = arith.constant 0 : index
    %c0_3 = arith.constant 0 : index
    %1 = vector.load %arg3[%c0_1, %c0_2, %c0_3] : memref<1x112x512xbf16, #tpu.memory_space<vmem>>, vector<1x112x512xbf16>
    %2 = vector.shape_cast %1 : vector<1x112x512xbf16> to vector<112x512xbf16>
    %cst = arith.constant dense<0.000000e+00> : vector<16x512xf32>
    %3 = tpu.matmul %0, %2, %cst {dimension_numbers = #tpu.dot_dimension_numbers<[1], [0], [0], [1], [0, 0, 1, 1], [], []>} : vector<16x112xbf16>, vector<112x512xbf16>, vector<16x512xf32> -> vector<16x512xf32>
    %4 = arith.truncf %3 : vector<16x512xf32> to vector<16x512xbf16>
    %c0_4 = arith.constant 0 : index
    %c0_5 = arith.constant 0 : index
    %c0_6 = arith.constant 0 : index
    %5 = vector.load %arg4[%c0_4, %c0_5, %c0_6] : memref<1x16x512xbf16, #tpu.memory_space<vmem>>, vector<1x16x512xbf16>
    %6 = vector.shape_cast %5 : vector<1x16x512xbf16> to vector<16x512xbf16>
    %7 = vector.shape_cast %4 : vector<16x512xbf16> to vector<1x16x512xbf16>
    tpu.vector_store %arg4[%c0_4, %c0_5, %c0_6], %7 {strides = array<i32>} : memref<1x16x512xbf16, #tpu.memory_space<vmem>>, vector<1x16x512xbf16>,
    %cst_7 = arith.constant dense<0.000000e+00> : vector<16xf32>
    %8 = vector.multi_reduction <add>, %3, %cst_7 [1] : vector<16x512xf32> to vector<16xf32>
    %9 = vector.shape_cast %8 : vector<16xf32> to vector<16x1xf32>
    %10 = arith.mulf %3, %3 : vector<16x512xf32>
    %cst_8 = arith.constant dense<0.000000e+00> : vector<16xf32>
    %11 = vector.multi_reduction <add>, %10, %cst_8 [1] : vector<16x512xf32> to vector<16xf32>
    %12 = vector.shape_cast %11 : vector<16xf32> to vector<16x1xf32>
    %13 = tpu.concatenate %9, %12 in 1 : vector<16x1xf32>, vector<16x1xf32> -> vector<16x2xf32>
    %c0_i32 = arith.constant 0 : i32
    %14 = arith.cmpi eq, %arg1, %c0_i32 : i32
    %15 = arith.extui %14 : i1 to i32
    %c0_i32_9 = arith.constant 0 : i32
    %16 = arith.cmpi ne, %15, %c0_i32_9 : i32
    scf.if %16 {
      %c0_12 = arith.constant 0 : index
      %c0_13 = arith.constant 0 : index
      %c0_14 = arith.constant 0 : index
      %20 = vector.load %arg5[%c0_12, %c0_13, %c0_14] : memref<1x16x2xf32, #tpu.memory_space<vmem>>, vector<1x16x2xf32>
      %21 = vector.shape_cast %20 : vector<1x16x2xf32> to vector<16x2xf32>
      %22 = vector.shape_cast %13 : vector<16x2xf32> to vector<1x16x2xf32>
      tpu.vector_store %arg5[%c0_12, %c0_13, %c0_14], %22 {strides = array<i32>} : memref<1x16x2xf32, #tpu.memory_space<vmem>>, vector<1x16x2xf32>,
    } else {
    }
    %c0_i32_10 = arith.constant 0 : i32
    %17 = arith.cmpi sgt, %arg1, %c0_i32_10 : i32
    %18 = arith.extui %17 : i1 to i32
    %c0_i32_11 = arith.constant 0 : i32
    %19 = arith.cmpi ne, %18, %c0_i32_11 : i32
    scf.if %19 {
      %c0_12 = arith.constant 0 : index
      %c0_13 = arith.constant 0 : index
      %c0_14 = arith.constant 0 : index
      %20 = vector.load %arg5[%c0_12, %c0_13, %c0_14] : memref<1x16x2xf32, #tpu.memory_space<vmem>>, vector<1x16x2xf32>
      %21 = vector.shape_cast %20 : vector<1x16x2xf32> to vector<16x2xf32>
      %22 = arith.addf %21, %13 : vector<16x2xf32>
      %c0_15 = arith.constant 0 : index
      %c0_16 = arith.constant 0 : index
      %c0_17 = arith.constant 0 : index
      %23 = vector.load %arg5[%c0_15, %c0_16, %c0_17] : memref<1x16x2xf32, #tpu.memory_space<vmem>>, vector<1x16x2xf32>
      %24 = vector.shape_cast %23 : vector<1x16x2xf32> to vector<16x2xf32>
      %25 = vector.shape_cast %22 : vector<16x2xf32> to vector<1x16x2xf32>
      tpu.vector_store %arg5[%c0_15, %c0_16, %c0_17], %25 {strides = array<i32>} : memref<1x16x2xf32, #tpu.memory_space<vmem>>, vector<1x16x2xf32>,
    } else {
    }
    return
  }
  func.func @transform_0(%arg0: i32, %arg1: i32) -> (i32, i32) {
    %c0_i32 = arith.constant 0 : i32
    %c0_i32_0 = arith.constant 0 : i32
    %c0_i32_1 = arith.constant 0 : i32
    return %c0_i32, %c0_i32_0 : i32, i32
  }
  func.func @transform_1(%arg0: i32, %arg1: i32) -> (i32, i32, i32) {
    %c0_i32 = arith.constant 0 : i32
    %c0_i32_0 = arith.constant 0 : i32
    return %arg0, %c0_i32, %arg1 : i32, i32, i32
  }
  func.func @transform_2(%arg0: i32, %arg1: i32) -> (i32, i32, i32) {
    %c0_i32 = arith.constant 0 : i32
    %c0_i32_0 = arith.constant 0 : i32
    return %arg0, %c0_i32, %arg1 : i32, i32, i32
  }
  func.func @transform_3(%arg0: i32, %arg1: i32) -> (i32, i32, i32) {
    %c0_i32 = arith.constant 0 : i32
    %c0_i32_0 = arith.constant 0 : i32
    %c0_i32_1 = arith.constant 0 : i32
    return %arg0, %c0_i32, %c0_i32_0 : i32, i32, i32
  }
}

module attributes {stable_mosaic.version = 11 : i64} {
  func.func @bn_relu_kernel(%arg0: i32, %arg1: i32, %arg2: memref<16x1xf32, #tpu.memory_space<vmem>>, %arg3: memref<16x1xf32, #tpu.memory_space<vmem>>, %arg4: memref<1x16x512xbf16, #tpu.memory_space<vmem>>, %arg5: memref<1x16x512xf32, #tpu.memory_space<vmem>>) attributes {dimension_semantics = [#tpu.dimension_semantics<parallel>, #tpu.dimension_semantics<parallel>], iteration_bounds = array<i64: 2, 1>, scalar_prefetch = 0 : i64, scratch_operands = 0 : i64, tpu.core_type = #tpu.core_type<tc>, window_params = [{pipeline_mode = #tpu.pipeline_mode<synchronous>, transform_indices = @transform_0, window_bounds = array<i64: 16, 1>}, {pipeline_mode = #tpu.pipeline_mode<synchronous>, transform_indices = @transform_1, window_bounds = array<i64: 16, 1>}, {transform_indices = @transform_2, window_bounds = array<i64: 1, 16, 512>}, {transform_indices = @transform_3, window_bounds = array<i64: 1, 16, 512>}]} {
    %c0 = arith.constant 0 : index
    %c0_0 = arith.constant 0 : index
    %c0_1 = arith.constant 0 : index
    %0 = vector.load %arg4[%c0, %c0_0, %c0_1] : memref<1x16x512xbf16, #tpu.memory_space<vmem>>, vector<1x16x512xbf16>
    %1 = vector.shape_cast %0 : vector<1x16x512xbf16> to vector<16x512xbf16>
    %2 = arith.extf %1 : vector<16x512xbf16> to vector<16x512xf32>
    %c0_2 = arith.constant 0 : index
    %c0_3 = arith.constant 0 : index
    %3 = vector.load %arg2[%c0_2, %c0_3] : memref<16x1xf32, #tpu.memory_space<vmem>>, vector<16x1xf32>
    %4 = vector.broadcast %3 : vector<16x1xf32> to vector<16x512xf32>
    %5 = arith.mulf %2, %4 : vector<16x512xf32>
    %c0_4 = arith.constant 0 : index
    %c0_5 = arith.constant 0 : index
    %6 = vector.load %arg3[%c0_4, %c0_5] : memref<16x1xf32, #tpu.memory_space<vmem>>, vector<16x1xf32>
    %7 = vector.broadcast %6 : vector<16x1xf32> to vector<16x512xf32>
    %8 = arith.addf %5, %7 : vector<16x512xf32>
    %cst = arith.constant 0.000000e+00 : f32
    %9 = vector.broadcast %cst : f32 to vector<16x512xf32>
    %10 = arith.maximumf %8, %9 : vector<16x512xf32>
    %c0_6 = arith.constant 0 : index
    %c0_7 = arith.constant 0 : index
    %c0_8 = arith.constant 0 : index
    %11 = vector.load %arg5[%c0_6, %c0_7, %c0_8] : memref<1x16x512xf32, #tpu.memory_space<vmem>>, vector<1x16x512xf32>
    %12 = vector.shape_cast %11 : vector<1x16x512xf32> to vector<16x512xf32>
    %13 = vector.shape_cast %10 : vector<16x512xf32> to vector<1x16x512xf32>
    tpu.vector_store %arg5[%c0_6, %c0_7, %c0_8], %13 {strides = array<i32>} : memref<1x16x512xf32, #tpu.memory_space<vmem>>, vector<1x16x512xf32>,
    return
  }
  func.func @transform_0(%arg0: i32, %arg1: i32) -> (i32, i32) {
    %c0_i32 = arith.constant 0 : i32
    %c0_i32_0 = arith.constant 0 : i32
    %c0_i32_1 = arith.constant 0 : i32
    return %c0_i32, %c0_i32_0 : i32, i32
  }
  func.func @transform_1(%arg0: i32, %arg1: i32) -> (i32, i32) {
    %c0_i32 = arith.constant 0 : i32
    %c0_i32_0 = arith.constant 0 : i32
    %c0_i32_1 = arith.constant 0 : i32
    return %c0_i32, %c0_i32_0 : i32, i32
  }
  func.func @transform_2(%arg0: i32, %arg1: i32) -> (i32, i32, i32) {
    %c0_i32 = arith.constant 0 : i32
    %c0_i32_0 = arith.constant 0 : i32
    return %arg0, %c0_i32, %arg1 : i32, i32, i32
  }
  func.func @transform_3(%arg0: i32, %arg1: i32) -> (i32, i32, i32) {
    %c0_i32 = arith.constant 0 : i32
    %c0_i32_0 = arith.constant 0 : i32
    return %arg0, %c0_i32, %arg1 : i32, i32, i32
  }
}

</mosaic_0001>

<llo_original>
// kernel: basic_block_forward.4
$region0: #{basic_block_forward.4}
  #allocation0 [shape = 'u32[]', space=smem, size = 0x4, offset = 0x4, fixed_abs, tag = 'smem constant byte address 0x4 - core index']
  #allocation1 [shape = 'u32[144,128]{1,0:T(1,128)}', space=vmem, size = 0x12000, scoped, tag = 'internal scratch']
  #allocation2 [shape = 'u32[2048]{0}', space=vmem, size = 0x2000, scoped, tag = 'scoped memory for basic_block_forward.4']
  #allocation3 [shape = 'u32[2048]{0}', space=vmem, size = 0x2000, scoped, tag = 'scoped memory for basic_block_forward.4']
  #allocation4 [shape = 'u32[2048]{0}', space=vmem, size = 0x2000, scoped, tag = 'scoped memory for basic_block_forward.4']
  #allocation5 [shape = 'u32[2048]{0}', space=vmem, size = 0x2000, scoped, tag = 'scoped memory for basic_block_forward.4']
  #allocation6 [shape = 'u32[2048]{0}', space=vmem, size = 0x2000, scoped, tag = 'scoped memory for basic_block_forward.4']
  %s0 = inlined_call_operand.vmem [shape: bf16[16,112], index: 0, kind: input, shape index: {}]
  %s1 = inlined_call_operand.vmem [shape: bf16[2,108,512], index: 1, kind: input, shape index: {}]
  %s2 = inlined_call_operand.<no memory space> [shape: bf16[], index: 2, kind: input, shape index: {}]
  %s3 = inlined_call_operand.vmem [shape: bf16[2,16,512], index: 3, kind: output, shape index: {0}]
  %s4 = inlined_call_operand.vmem [shape: f32[2,16,2], index: 4, kind: output, shape index: {1}]
  %5 = xla_tuple %s3, %s4
  %s6 = sld [smem:[#allocation0]]
  $region57: #{basic_block_forward.4} parent=0
    _
  %s8 = ssub.s32 1, %s6
  %s9 = scalar_select 0, %s8, %s6
  %v10 = vstv %s2
  %v11 = vunpack.i.l.bf16 %v10
  %v13 = vunpack.i.h.bf16 %v10
  loop: start=0, step=1, limit=4
  $region2: #{basic_block_forward.4} parent=0 // loop_pre_header
    _
  $region3: #{basic_block_forward.4} parent=0 // loop_header
    %s16 = sphi 0, %s20
    %p17 = scmp.ge.s32.totalorder %s16, 4
    %s23 = sphi 0, %s35
    %s24 = sphi 0, %s31
    %s25 = sphi 0, %s23
    %s26 = sphi 0, %s24
    %s27 = sphi 0, %s25
    %s28 = sphi 0, %s26
    %s36 = sphi 0, %s36
    %s38 = sphi 0, %s36
    %s39 = sphi 0, %s38
    %s53 = sphi 0, %s39
    %s61 = sphi 0, %s63
    %s64 = sphi 0, %s61
    %s65 = sphi 0, %s64
    %s81 = sphi 0, %s65
    %s89 = sphi 0, %s91
    %s92 = sphi 0, %s89
    %s93 = sphi 0, %s92
    %s109 = sphi 0, %s93
    %s115 = sphi 0, %s117
    %s118 = sphi 0, %s115
    %s119 = sphi 0, %s118
    %s135 = sphi 0, %s119
  $region4: #{basic_block_forward.4} parent=0 // loop_header_branch
    %19 = sbr.rel (%p17) target = $region8
  $region5: #{basic_block_forward.4} parent=0 // loop_body
    %s21 = ssub.s32 %s16, 1
    %s22 = ssub.s32 %s16, 2
    %s29 = sadd.s32 1, %s24
    %p30 = scmp.ge.s32.totalorder %s29, 1
    %s31 = scalar_select %p30, 0, %s29
    %s32 = sadd.s32 1, %s23
    %s33 = scalar_select %p30, %s32, %s23
    %p34 = scmp.ge.s32.totalorder %s33, 2
    %s35 = scalar_select %p34, 0, %s33
    %s37 = sadd.s32 %s36, 1
    %p40 = scmp.eq.s32.totalorder %s16, 1
    %p41 = scmp.ne.s32.totalorder %s36, %s38
    %p42 = scmp.eq.s32.totalorder %s16, 0
    %p43 = por %p41, %p42
    %p44 = scmp.ne.s32.totalorder %s36, %s38
    %p45 = scmp.eq.s32.totalorder %s21, 1
    %p46 = por %p44, %p45
    %p47 = scmp.ne.s32.totalorder %s38, %s39
    %p48 = scmp.eq.s32.totalorder %s21, 0
    %p49 = por %p47, %p48
    %p50 = scmp.ne.s32.totalorder %s38, %s39
    %p51 = scmp.eq.s32.totalorder %s22, 1
    %p52 = por %p50, %p51
    %p54 = scmp.ne.s32.totalorder %s39, %s53
    %p55 = scmp.eq.s32.totalorder %s22, 0
    %p56 = por %p54, %p55
    %s57 = ssub.s32 %s23, %s35
    %s58 = ssub.s32 %s24, %s31
    %s59 = sor.u32 %s57, %s58
    %p60 = scmp.eq.s32.totalorder %s59, 0
    %s62 = sadd.s32 %s61, 1
    %s63 = scalar_select %p60, %s61, %s62
    %p66 = pneg %p60
    %p67 = scmp.eq.s32.totalorder %s16, 1
    %p68 = por %p66, %p67
    %p69 = scmp.ne.s32.totalorder %s61, %s64
    %p70 = scmp.eq.s32.totalorder %s16, 0
    %p71 = por %p69, %p70
    %p72 = scmp.ne.s32.totalorder %s61, %s64
    %p73 = scmp.eq.s32.totalorder %s21, 1
    %p74 = por %p72, %p73
    %p75 = scmp.ne.s32.totalorder %s64, %s65
    %p76 = scmp.eq.s32.totalorder %s21, 0
    %p77 = por %p75, %p76
    %p78 = scmp.ne.s32.totalorder %s64, %s65
    %p79 = scmp.eq.s32.totalorder %s22, 1
    %p80 = por %p78, %p79
    %p82 = scmp.ne.s32.totalorder %s65, %s81
    %p83 = scmp.eq.s32.totalorder %s22, 0
    %p84 = por %p82, %p83
    %s85 = ssub.s32 %s23, %s35
    %s86 = ssub.s32 %s24, %s31
    %s87 = sor.u32 %s85, %s86
    %p88 = scmp.eq.s32.totalorder %s87, 0
    %s90 = sadd.s32 %s89, 1
    %s91 = scalar_select %p88, %s89, %s90
    %p94 = pneg %p88
    %p95 = scmp.eq.s32.totalorder %s16, 1
    %p96 = por %p94, %p95
    %p97 = scmp.ne.s32.totalorder %s89, %s92
    %p98 = scmp.eq.s32.totalorder %s16, 0
    %p99 = por %p97, %p98
    %p100 = scmp.ne.s32.totalorder %s89, %s92
    %p101 = scmp.eq.s32.totalorder %s21, 1
    %p102 = por %p100, %p101
    %p103 = scmp.ne.s32.totalorder %s92, %s93
    %p104 = scmp.eq.s32.totalorder %s21, 0
    %p105 = por %p103, %p104
    %p106 = scmp.ne.s32.totalorder %s92, %s93
    %p107 = scmp.eq.s32.totalorder %s22, 1
    %p108 = por %p106, %p107
    %p110 = scmp.ne.s32.totalorder %s93, %s109
    %p111 = scmp.eq.s32.totalorder %s22, 0
    %p112 = por %p110, %p111
    %s113 = ssub.s32 %s23, %s35
    %p114 = scmp.eq.s32.totalorder %s113, 0
    %s116 = sadd.s32 %s115, 1
    %s117 = scalar_select %p114, %s115, %s116
    %p120 = pneg %p114
    %p121 = scmp.eq.s32.totalorder %s16, 1
    %p122 = por %p120, %p121
    %p123 = scmp.ne.s32.totalorder %s115, %s118
    %p124 = scmp.eq.s32.totalorder %s16, 0
    %p125 = por %p123, %p124
    %p126 = scmp.ne.s32.totalorder %s115, %s118
    %p127 = scmp.eq.s32.totalorder %s21, 1
    %p128 = por %p126, %p127
    %p129 = scmp.ne.s32.totalorder %s118, %s119
    %p130 = scmp.eq.s32.totalorder %s21, 0
    %p131 = por %p129, %p130
    %p132 = scmp.ne.s32.totalorder %s118, %s119
    %p133 = scmp.eq.s32.totalorder %s22, 1
    %p134 = por %p132, %p133
    %p136 = scmp.ne.s32.totalorder %s119, %s135
    %p137 = scmp.eq.s32.totalorder %s22, 0
    %p138 = por %p136, %p137
    %p139 = scmp.le.s32.totalorder 1, %s16
    %p140 = scmp.lt.s32.totalorder %s16, 3
    %p141 = pnand %p139, %p140
    %p142 = pneg %p141
    // Predicated region
    $region9: #{basic_block_forward.4} parent=5 // pred_check
      _
    $region10: #{basic_block_forward.4} parent=5 // pred_check_branch
      %144 = sbr.rel (%p141) target = $region12
    $region11: #{basic_block_forward.4} parent=5 // pred_region
      %s145 = ssub.s32 %s16, 1
      // Predicated region
      $region13: #{basic_block_forward.4} parent=11 // pred_check
        %p146 = pneg %p49
      $region14: #{basic_block_forward.4} parent=11 // pred_check_branch
        %148 = sbr.rel (%p146) target = $region16
      $region15: #{basic_block_forward.4} parent=11 // pred_region
        _
      $region16: #{basic_block_forward.4} parent=11 // pred_fallthru
        _
    $region12: #{basic_block_forward.4} parent=5 // pred_fallthru
      _
    %p149 = scmp.lt.s32.totalorder %s16, 2
    // Predicated region
    $region17: #{basic_block_forward.4} parent=5 // pred_check
      %p150 = pneg %p149
    $region18: #{basic_block_forward.4} parent=5 // pred_check_branch
      %152 = sbr.rel (%p150) target = $region20
    $region19: #{basic_block_forward.4} parent=5 // pred_region
      // Predicated region
      $region21: #{basic_block_forward.4} parent=19 // pred_check
        %p153 = pneg %p71
      $region22: #{basic_block_forward.4} parent=19 // pred_check_branch
        %155 = sbr.rel (%p153) target = $region24
      $region23: #{basic_block_forward.4} parent=19 // pred_region
        %s156 = smul.u32 4, %s24
        %p157 = scmp.lt.s32.totalorder %s23, 1
        %s158 = scalar_select %p157, %s23, 1
        %p159 = scmp.lt.s32.totalorder %s156, 3
        %s160 = scalar_select %p159, %s156, 3
        %s161 = smul.addr %s158, 56
        %s162 = sadd.s32 %s160, %s161
        %s163 = smul.addr %s162, 4
        %s164 = scalar_lea.vmem %s1, %s163
        %s165 = smul.u32 4, %s24
      $region24: #{basic_block_forward.4} parent=19 // pred_fallthru
        _
    $region20: #{basic_block_forward.4} parent=5 // pred_fallthru
      _
    %p166 = scmp.le.s32.totalorder 1, %s16
    %p167 = scmp.lt.s32.totalorder %s16, 3
    %p168 = pnand %p166, %p167
    %p169 = pneg %p168
    // Predicated region
    $region25: #{basic_block_forward.4} parent=5 // pred_check
      _
    $region26: #{basic_block_forward.4} parent=5 // pred_check_branch
      %171 = sbr.rel (%p168) target = $region28
    $region27: #{basic_block_forward.4} parent=5 // pred_region
      #allocation7 [shape = 'u8[114688]{0}', space=vmem, size = 0x1c000, dematerialized = true, scoped, tag = 'FusionAdapter Buffer %fusion.1 = bf16[2,112,512]{2,1,0:T(8,128)(2,1)} fusion(%param_1.1, %param_2), kind=kLoop, calls=%fused_computation.1.clone, metadata={op_name="jit(basic_block_forward)/jit(_pad)/pad" stack_frame_id=14}']
      %s172 = ssub.s32 %s16, 1
      %p173 = pneg %p49
      %p174 = pneg %p46
      %s175 = smul.u32 4, %s26
      %p176 = scmp.lt.s32.totalorder %s25, 1
      %s177 = scalar_select %p176, %s25, 1
      %p178 = scmp.lt.s32.totalorder %s175, 3
      %s179 = scalar_select %p178, %s175, 3
      %s180 = smul.addr %s177, 56
      %s181 = sadd.s32 %s179, %s180
      %s182 = smul.addr %s181, 4
      %s183 = scalar_lea.vmem %s1, %s182
      %p184 = pneg %p77
      %p185 = pneg %p74
      %p186 = pneg %p105
      %p187 = pneg %p102
      %s188 = smul.u32 4, %s26
      %p189 = scmp.lt.s32.totalorder %s25, 1
      %s190 = scalar_select %p189, %s25, 1
      %p191 = scmp.lt.s32.totalorder %s188, 3
      %s192 = scalar_select %p191, %s188, 3
      %s193 = smul.addr %s190, 8
      %s194 = sadd.s32 %s192, %s193
      %s195 = smul.addr %s194, 4
      %s196 = scalar_lea.vmem %s3, %s195
      %p197 = pneg %p131
      %p198 = pneg %p128
      %p199 = scmp.lt.s32.totalorder %s25, 1
      %s200 = scalar_select %p199, %s25, 1
      %s201 = smul.addr %s200, 2
      %s202 = smul.addr %s201, 8
      %s203 = scalar_lea.vmem %s4, %s202
      %s204 = smul.u32 4, %s26
      %p205 = scmp.lt.s32.totalorder %s25, 1
      %s206 = scalar_select %p205, %s25, 1
      %p207 = scmp.lt.s32.totalorder %s204, 3
      %s208 = scalar_select %p207, %s204, 3
      %s209 = smul.addr %s206, 56
      %s210 = sadd.s32 %s208, %s209
      %s211 = smul.addr %s210, 4
      %s212 = scalar_lea.vmem %s1, %s211
      %s213 = smul.u32 4, %s26
      %s214 = smul.u32 4, %s26
      %p215 = scmp.lt.s32.totalorder %s25, 1
      %s216 = scalar_select %p215, %s25, 1
      %p217 = scmp.lt.s32.totalorder %s214, 3
      %s218 = scalar_select %p217, %s214, 3
      %s219 = smul.addr %s216, 8
      %s220 = sadd.s32 %s218, %s219
      %s221 = smul.addr %s220, 4
      %s222 = scalar_lea.vmem %s3, %s221
      %s223 = smul.u32 4, %s26
      %p224 = scmp.lt.s32.totalorder %s25, 1
      %s225 = scalar_select %p224, %s25, 1
      %s226 = smul.addr %s225, 2
      %s227 = smul.addr %s226, 8
      %s228 = scalar_lea.vmem %s4, %s227
      %v229 = vld [vmem:[%s212] sm:$0xf]
      %v230 = vunpack.c.l.bf16 %v229
      %v231 = vunpack.c.h.bf16 %v229
      %v232 = vlaneseq
      %v233 = vshrl.u32 %v232, 7
      %vm235 = vcmp.lt.s32.totalorder %v233, 108
      %v236 = vsel %vm235, %v230, %v11
      %v237 = vpack.c.bf16 0.0, %v236
      %s239 = ssub.s32 16, 1
      %240 = vst [vmem:[#allocation7] sm:%s239] %v237
      %s241 = scalar_lea.vmem %s212, 4
      %v242 = vld [vmem:[%s241] sm:$0xf]
      %v243 = vunpack.c.l.bf16 %v242
      %v244 = vunpack.c.h.bf16 %v242
      %v245 = vlaneseq
      %v246 = vshrl.u32 %v245, 7
      %vm248 = vcmp.lt.s32.totalorder %v246, 108
      %v249 = vsel %vm248, %v243, %v11
      %s250 = scalar_lea.vmem [#allocation7], 4
      %v251 = vpack.c.bf16 0.0, %v249
      %s253 = ssub.s32 16, 1
      %254 = vst [vmem:[%s250] sm:%s253] %v251
      %s255 = scalar_lea.vmem %s212, 8
      %v256 = vld [vmem:[%s255] sm:$0xf]
      %v257 = vunpack.c.l.bf16 %v256
      %v258 = vunpack.c.h.bf16 %v256
      %v259 = vlaneseq
      %v260 = vshrl.u32 %v259, 7
      %vm262 = vcmp.lt.s32.totalorder %v260, 108
      %v263 = vsel %vm262, %v257, %v11
      %s264 = scalar_lea.vmem [#allocation7], 8
      %v265 = vpack.c.bf16 0.0, %v263
      %s267 = ssub.s32 16, 1
      %268 = vst [vmem:[%s264] sm:%s267] %v265
      %s269 = scalar_lea.vmem %s212, 12
      %v270 = vld [vmem:[%s269] sm:$0xf]
      %v271 = vunpack.c.l.bf16 %v270
      %v272 = vunpack.c.h.bf16 %v270
      %v273 = vlaneseq
      %v274 = vshrl.u32 %v273, 7
      %vm276 = vcmp.lt.s32.totalorder %v274, 108
      %v277 = vsel %vm276, %v271, %v11
      %s278 = scalar_lea.vmem [#allocation7], 12
      %v279 = vpack.c.bf16 0.0, %v277
      %s281 = ssub.s32 16, 1
      %282 = vst [vmem:[%s278] sm:%s281] %v279
      %s283 = scalar_lea.vmem %s212, 16
      %v284 = vld [vmem:[%s283] sm:$0xf]
      %v285 = vunpack.c.l.bf16 %v284
      %v286 = vunpack.c.h.bf16 %v284
      %v287 = vlaneseq
      %v288 = vshrl.u32 %v287, 7
      %v289 = vadd.s32 %v288, 8
      %vm290 = vcmp.lt.s32.totalorder %v289, 108
      %v291 = vsel %vm290, %v285, %v11
      %s292 = scalar_lea.vmem [#allocation7], 16
      %v293 = vpack.c.bf16 0.0, %v291
      %s295 = ssub.s32 16, 1
      %296 = vst [vmem:[%s292] sm:%s295] %v293
      %s297 = scalar_lea.vmem %s212, 20
      %v298 = vld [vmem:[%s297] sm:$0xf]
      %v299 = vunpack.c.l.bf16 %v298
      %v300 = vunpack.c.h.bf16 %v298
      %v301 = vlaneseq
      %v302 = vshrl.u32 %v301, 7
      %v303 = vadd.s32 %v302, 8
      %vm304 = vcmp.lt.s32.totalorder %v303, 108
      %v305 = vsel %vm304, %v299, %v11
      %s306 = scalar_lea.vmem [#allocation7], 20
      %v307 = vpack.c.bf16 0.0, %v305
      %s309 = ssub.s32 16, 1
      %310 = vst [vmem:[%s306] sm:%s309] %v307
      %s311 = scalar_lea.vmem %s212, 24
      %v312 = vld [vmem:[%s311] sm:$0xf]
      %v313 = vunpack.c.l.bf16 %v312
      %v314 = vunpack.c.h.bf16 %v312
      %v315 = vlaneseq
      %v316 = vshrl.u32 %v315, 7
      %v317 = vadd.s32 %v316, 8
      %vm318 = vcmp.lt.s32.totalorder %v317, 108
      %v319 = vsel %vm318, %v313, %v11
      %s320 = scalar_lea.vmem [#allocation7], 24
      %v321 = vpack.c.bf16 0.0, %v319
      %s323 = ssub.s32 16, 1
      %324 = vst [vmem:[%s320] sm:%s323] %v321
      %s325 = scalar_lea.vmem %s212, 28
      %v326 = vld [vmem:[%s325] sm:$0xf]
      %v327 = vunpack.c.l.bf16 %v326
      %v328 = vunpack.c.h.bf16 %v326
      %v329 = vlaneseq
      %v330 = vshrl.u32 %v329, 7
      %v331 = vadd.s32 %v330, 8
      %vm332 = vcmp.lt.s32.totalorder %v331, 108
      %v333 = vsel %vm332, %v327, %v11
      %s334 = scalar_lea.vmem [#allocation7], 28
      %v335 = vpack.c.bf16 0.0, %v333
      %s337 = ssub.s32 16, 1
      %338 = vst [vmem:[%s334] sm:%s337] %v335
      %s339 = scalar_lea.vmem %s212, 32
      %v340 = vld [vmem:[%s339] sm:$0xf]
      %v341 = vunpack.c.l.bf16 %v340
      %v342 = vunpack.c.h.bf16 %v340
      %v343 = vlaneseq
      %v344 = vshrl.u32 %v343, 7
      %v345 = vadd.s32 %v344, 16
      %vm346 = vcmp.lt.s32.totalorder %v345, 108
      %v347 = vsel %vm346, %v341, %v11
      %s348 = scalar_lea.vmem [#allocation7], 32
      %v349 = vpack.c.bf16 0.0, %v347
      %s351 = ssub.s32 16, 1
      %352 = vst [vmem:[%s348] sm:%s351] %v349
      %s353 = scalar_lea.vmem %s212, 36
      %v354 = vld [vmem:[%s353] sm:$0xf]
      %v355 = vunpack.c.l.bf16 %v354
      %v356 = vunpack.c.h.bf16 %v354
      %v357 = vlaneseq
      %v358 = vshrl.u32 %v357, 7
      %v359 = vadd.s32 %v358, 16
      %vm360 = vcmp.lt.s32.totalorder %v359, 108
      %v361 = vsel %vm360, %v355, %v11
      %s362 = scalar_lea.vmem [#allocation7], 36
      %v363 = vpack.c.bf16 0.0, %v361
      %s365 = ssub.s32 16, 1
      %366 = vst [vmem:[%s362] sm:%s365] %v363
      %s367 = scalar_lea.vmem %s212, 40
      %v368 = vld [vmem:[%s367] sm:$0xf]
      %v369 = vunpack.c.l.bf16 %v368
      %v370 = vunpack.c.h.bf16 %v368
      %v371 = vlaneseq
      %v372 = vshrl.u32 %v371, 7
      %v373 = vadd.s32 %v372, 16
      %vm374 = vcmp.lt.s32.totalorder %v373, 108
      %v375 = vsel %vm374, %v369, %v11
      %s376 = scalar_lea.vmem [#allocation7], 40
      %v377 = vpack.c.bf16 0.0, %v375
      %s379 = ssub.s32 16, 1
      %380 = vst [vmem:[%s376] sm:%s379] %v377
      %s381 = scalar_lea.vmem %s212, 44
      %v382 = vld [vmem:[%s381] sm:$0xf]
      %v383 = vunpack.c.l.bf16 %v382
      %v384 = vunpack.c.h.bf16 %v382
      %v385 = vlaneseq
      %v386 = vshrl.u32 %v385, 7
      %v387 = vadd.s32 %v386, 16
      %vm388 = vcmp.lt.s32.totalorder %v387, 108
      %v389 = vsel %vm388, %v383, %v11
      %s390 = scalar_lea.vmem [#allocation7], 44
      %v391 = vpack.c.bf16 0.0, %v389
      %s393 = ssub.s32 16, 1
      %394 = vst [vmem:[%s390] sm:%s393] %v391
      %s395 = scalar_lea.vmem %s212, 48
      %v396 = vld [vmem:[%s395] sm:$0xf]
      %v397 = vunpack.c.l.bf16 %v396
      %v398 = vunpack.c.h.bf16 %v396
      %v399 = vlaneseq
      %v400 = vshrl.u32 %v399, 7
      %v401 = vadd.s32 %v400, 24
      %vm402 = vcmp.lt.s32.totalorder %v401, 108
      %v403 = vsel %vm402, %v397, %v11
      %s404 = scalar_lea.vmem [#allocation7], 48
      %v405 = vpack.c.bf16 0.0, %v403
      %s407 = ssub.s32 16, 1
      %408 = vst [vmem:[%s404] sm:%s407] %v405
      %s409 = scalar_lea.vmem %s212, 52
      %v410 = vld [vmem:[%s409] sm:$0xf]
      %v411 = vunpack.c.l.bf16 %v410
      %v412 = vunpack.c.h.bf16 %v410
      %v413 = vlaneseq
      %v414 = vshrl.u32 %v413, 7
      %v415 = vadd.s32 %v414, 24
      %vm416 = vcmp.lt.s32.totalorder %v415, 108
      %v417 = vsel %vm416, %v411, %v11
      %s418 = scalar_lea.vmem [#allocation7], 52
      %v419 = vpack.c.bf16 0.0, %v417
      %s421 = ssub.s32 16, 1
      %422 = vst [vmem:[%s418] sm:%s421] %v419
      %s423 = scalar_lea.vmem %s212, 56
      %v424 = vld [vmem:[%s423] sm:$0xf]
      %v425 = vunpack.c.l.bf16 %v424
      %v426 = vunpack.c.h.bf16 %v424
      %v427 = vlaneseq
      %v428 = vshrl.u32 %v427, 7
      %v429 = vadd.s32 %v428, 24
      %vm430 = vcmp.lt.s32.totalorder %v429, 108
      %v431 = vsel %vm430, %v425, %v11
      %s432 = scalar_lea.vmem [#allocation7], 56
      %v433 = vpack.c.bf16 0.0, %v431
      %s435 = ssub.s32 16, 1
      %436 = vst [vmem:[%s432] sm:%s435] %v433
      %s437 = scalar_lea.vmem %s212, 60
      %v438 = vld [vmem:[%s437] sm:$0xf]
      %v439 = vunpack.c.l.bf16 %v438
      %v440 = vunpack.c.h.bf16 %v438
      %v441 = vlaneseq
      %v442 = vshrl.u32 %v441, 7
      %v443 = vadd.s32 %v442, 24
      %vm444 = vcmp.lt.s32.totalorder %v443, 108
      %v445 = vsel %vm444, %v439, %v11
      %s446 = scalar_lea.vmem [#allocation7], 60
      %v447 = vpack.c.bf16 0.0, %v445
      %s449 = ssub.s32 16, 1
      %450 = vst [vmem:[%s446] sm:%s449] %v447
      %s451 = scalar_lea.vmem %s212, 64
      %v452 = vld [vmem:[%s451] sm:$0xf]
      %v453 = vunpack.c.l.bf16 %v452
      %v454 = vunpack.c.h.bf16 %v452
      %v455 = vlaneseq
      %v456 = vshrl.u32 %v455, 7
      %v457 = vadd.s32 %v456, 32
      %vm458 = vcmp.lt.s32.totalorder %v457, 108
      %v459 = vsel %vm458, %v453, %v11
      %s460 = scalar_lea.vmem [#allocation7], 64
      %v461 = vpack.c.bf16 0.0, %v459
      %s463 = ssub.s32 16, 1
      %464 = vst [vmem:[%s460] sm:%s463] %v461
      %s465 = scalar_lea.vmem %s212, 68
      %v466 = vld [vmem:[%s465] sm:$0xf]
      %v467 = vunpack.c.l.bf16 %v466
      %v468 = vunpack.c.h.bf16 %v466
      %v469 = vlaneseq
      %v470 = vshrl.u32 %v469, 7
      %v471 = vadd.s32 %v470, 32
      %vm472 = vcmp.lt.s32.totalorder %v471, 108
      %v473 = vsel %vm472, %v467, %v11
      %s474 = scalar_lea.vmem [#allocation7], 68
      %v475 = vpack.c.bf16 0.0, %v473
      %s477 = ssub.s32 16, 1
      %478 = vst [vmem:[%s474] sm:%s477] %v475
      %s479 = scalar_lea.vmem %s212, 72
      %v480 = vld [vmem:[%s479] sm:$0xf]
      %v481 = vunpack.c.l.bf16 %v480
      %v482 = vunpack.c.h.bf16 %v480
      %v483 = vlaneseq
      %v484 = vshrl.u32 %v483, 7
      %v485 = vadd.s32 %v484, 32
      %vm486 = vcmp.lt.s32.totalorder %v485, 108
      %v487 = vsel %vm486, %v481, %v11
      %s488 = scalar_lea.vmem [#allocation7], 72
      %v489 = vpack.c.bf16 0.0, %v487
      %s491 = ssub.s32 16, 1
      %492 = vst [vmem:[%s488] sm:%s491] %v489
      %s493 = scalar_lea.vmem %s212, 76
      %v494 = vld [vmem:[%s493] sm:$0xf]
      %v495 = vunpack.c.l.bf16 %v494
      %v496 = vunpack.c.h.bf16 %v494
      %v497 = vlaneseq
      %v498 = vshrl.u32 %v497, 7
      %v499 = vadd.s32 %v498, 32
      %vm500 = vcmp.lt.s32.totalorder %v499, 108
      %v501 = vsel %vm500, %v495, %v11
      %s502 = scalar_lea.vmem [#allocation7], 76
      %v503 = vpack.c.bf16 0.0, %v501
      %s505 = ssub.s32 16, 1
      %506 = vst [vmem:[%s502] sm:%s505] %v503
      %s507 = scalar_lea.vmem %s212, 80
      %v508 = vld [vmem:[%s507] sm:$0xf]
      %v509 = vunpack.c.l.bf16 %v508
      %v510 = vunpack.c.h.bf16 %v508
      %v511 = vlaneseq
      %v512 = vshrl.u32 %v511, 7
      %v513 = vadd.s32 %v512, 40
      %vm514 = vcmp.lt.s32.totalorder %v513, 108
      %v515 = vsel %vm514, %v509, %v11
      %s516 = scalar_lea.vmem [#allocation7], 80
      %v517 = vpack.c.bf16 0.0, %v515
      %s519 = ssub.s32 16, 1
      %520 = vst [vmem:[%s516] sm:%s519] %v517
      %s521 = scalar_lea.vmem %s212, 84
      %v522 = vld [vmem:[%s521] sm:$0xf]
      %v523 = vunpack.c.l.bf16 %v522
      %v524 = vunpack.c.h.bf16 %v522
      %v525 = vlaneseq
      %v526 = vshrl.u32 %v525, 7
      %v527 = vadd.s32 %v526, 40
      %vm528 = vcmp.lt.s32.totalorder %v527, 108
      %v529 = vsel %vm528, %v523, %v11
      %s530 = scalar_lea.vmem [#allocation7], 84
      %v531 = vpack.c.bf16 0.0, %v529
      %s533 = ssub.s32 16, 1
      %534 = vst [vmem:[%s530] sm:%s533] %v531
      %s535 = scalar_lea.vmem %s212, 88
      %v536 = vld [vmem:[%s535] sm:$0xf]
      %v537 = vunpack.c.l.bf16 %v536
      %v538 = vunpack.c.h.bf16 %v536
      %v539 = vlaneseq
      %v540 = vshrl.u32 %v539, 7
      %v541 = vadd.s32 %v540, 40
      %vm542 = vcmp.lt.s32.totalorder %v541, 108
      %v543 = vsel %vm542, %v537, %v11
      %s544 = scalar_lea.vmem [#allocation7], 88
      %v545 = vpack.c.bf16 0.0, %v543
      %s547 = ssub.s32 16, 1
      %548 = vst [vmem:[%s544] sm:%s547] %v545
      %s549 = scalar_lea.vmem %s212, 92
      %v550 = vld [vmem:[%s549] sm:$0xf]
      %v551 = vunpack.c.l.bf16 %v550
      %v552 = vunpack.c.h.bf16 %v550
      %v553 = vlaneseq
      %v554 = vshrl.u32 %v553, 7
      %v555 = vadd.s32 %v554, 40
      %vm556 = vcmp.lt.s32.totalorder %v555, 108
      %v557 = vsel %vm556, %v551, %v11
      %s558 = scalar_lea.vmem [#allocation7], 92
      %v559 = vpack.c.bf16 0.0, %v557
      %s561 = ssub.s32 16, 1
      %562 = vst [vmem:[%s558] sm:%s561] %v559
      %s563 = scalar_lea.vmem %s212, 96
      %v564 = vld [vmem:[%s563] sm:$0xf]
      %v565 = vunpack.c.l.bf16 %v564
      %v566 = vunpack.c.h.bf16 %v564
      %v567 = vlaneseq
      %v568 = vshrl.u32 %v567, 7
      %v569 = vadd.s32 %v568, 48
      %vm570 = vcmp.lt.s32.totalorder %v569, 108
      %v571 = vsel %vm570, %v565, %v11
      %s572 = scalar_lea.vmem [#allocation7], 96
      %v573 = vpack.c.bf16 0.0, %v571
      %s575 = ssub.s32 16, 1
      %576 = vst [vmem:[%s572] sm:%s575] %v573
      %s577 = scalar_lea.vmem %s212, 100
      %v578 = vld [vmem:[%s577] sm:$0xf]
      %v579 = vunpack.c.l.bf16 %v578
      %v580 = vunpack.c.h.bf16 %v578
      %v581 = vlaneseq
      %v582 = vshrl.u32 %v581, 7
      %v583 = vadd.s32 %v582, 48
      %vm584 = vcmp.lt.s32.totalorder %v583, 108
      %v585 = vsel %vm584, %v579, %v11
      %s586 = scalar_lea.vmem [#allocation7], 100
      %v587 = vpack.c.bf16 0.0, %v585
      %s589 = ssub.s32 16, 1
      %590 = vst [vmem:[%s586] sm:%s589] %v587
      %s591 = scalar_lea.vmem %s212, 104
      %v592 = vld [vmem:[%s591] sm:$0xf]
      %v593 = vunpack.c.l.bf16 %v592
      %v594 = vunpack.c.h.bf16 %v592
      %v595 = vlaneseq
      %v596 = vshrl.u32 %v595, 7
      %v597 = vadd.s32 %v596, 48
      %vm598 = vcmp.lt.s32.totalorder %v597, 108
      %v599 = vsel %vm598, %v593, %v11
      %s600 = scalar_lea.vmem [#allocation7], 104
      %v601 = vpack.c.bf16 0.0, %v599
      %s603 = ssub.s32 16, 1
      %604 = vst [vmem:[%s600] sm:%s603] %v601
      %s605 = scalar_lea.vmem %s212, 108
      %v606 = vld [vmem:[%s605] sm:$0xf]
      %v607 = vunpack.c.l.bf16 %v606
      %v608 = vunpack.c.h.bf16 %v606
      %v609 = vlaneseq
      %v610 = vshrl.u32 %v609, 7
      %v611 = vadd.s32 %v610, 48
      %vm612 = vcmp.lt.s32.totalorder %v611, 108
      %v613 = vsel %vm612, %v607, %v11
      %s614 = scalar_lea.vmem [#allocation7], 108
      %v615 = vpack.c.bf16 0.0, %v613
      %s617 = ssub.s32 16, 1
      %618 = vst [vmem:[%s614] sm:%s617] %v615
      %s619 = scalar_lea.vmem %s212, 112
      %v620 = vld [vmem:[%s619] sm:$0xf]
      %v621 = vunpack.c.l.bf16 %v620
      %v622 = vunpack.c.h.bf16 %v620
      %v623 = vlaneseq
      %v624 = vshrl.u32 %v623, 7
      %v625 = vadd.s32 %v624, 56
      %vm626 = vcmp.lt.s32.totalorder %v625, 108
      %v627 = vsel %vm626, %v621, %v11
      %s628 = scalar_lea.vmem [#allocation7], 112
      %v629 = vpack.c.bf16 0.0, %v627
      %s631 = ssub.s32 16, 1
      %632 = vst [vmem:[%s628] sm:%s631] %v629
      %s633 = scalar_lea.vmem %s212, 116
      %v634 = vld [vmem:[%s633] sm:$0xf]
      %v635 = vunpack.c.l.bf16 %v634
      %v636 = vunpack.c.h.bf16 %v634
      %v637 = vlaneseq
      %v638 = vshrl.u32 %v637, 7
      %v639 = vadd.s32 %v638, 56
      %vm640 = vcmp.lt.s32.totalorder %v639, 108
      %v641 = vsel %vm640, %v635, %v11
      %s642 = scalar_lea.vmem [#allocation7], 116
      %v643 = vpack.c.bf16 0.0, %v641
      %s645 = ssub.s32 16, 1
      %646 = vst [vmem:[%s642] sm:%s645] %v643
      %s647 = scalar_lea.vmem %s212, 120
      %v648 = vld [vmem:[%s647] sm:$0xf]
      %v649 = vunpack.c.l.bf16 %v648
      %v650 = vunpack.c.h.bf16 %v648
      %v651 = vlaneseq
      %v652 = vshrl.u32 %v651, 7
      %v653 = vadd.s32 %v652, 56
      %vm654 = vcmp.lt.s32.totalorder %v653, 108
      %v655 = vsel %vm654, %v649, %v11
      %s656 = scalar_lea.vmem [#allocation7], 120
      %v657 = vpack.c.bf16 0.0, %v655
      %s659 = ssub.s32 16, 1
      %660 = vst [vmem:[%s656] sm:%s659] %v657
      %s661 = scalar_lea.vmem %s212, 124
      %v662 = vld [vmem:[%s661] sm:$0xf]
      %v663 = vunpack.c.l.bf16 %v662
      %v664 = vunpack.c.h.bf16 %v662
      %v665 = vlaneseq
      %v666 = vshrl.u32 %v665, 7
      %v667 = vadd.s32 %v666, 56
      %vm668 = vcmp.lt.s32.totalorder %v667, 108
      %v669 = vsel %vm668, %v663, %v11
      %s670 = scalar_lea.vmem [#allocation7], 124
      %v671 = vpack.c.bf16 0.0, %v669
      %s673 = ssub.s32 16, 1
      %674 = vst [vmem:[%s670] sm:%s673] %v671
      %s675 = scalar_lea.vmem %s212, 128
      %v676 = vld [vmem:[%s675] sm:$0xf]
      %v677 = vunpack.c.l.bf16 %v676
      %v678 = vunpack.c.h.bf16 %v676
      %v679 = vlaneseq
      %v680 = vshrl.u32 %v679, 7
      %v681 = vadd.s32 %v680, 64
      %vm682 = vcmp.lt.s32.totalorder %v681, 108
      %v683 = vsel %vm682, %v677, %v11
      %s684 = scalar_lea.vmem [#allocation7], 128
      %v685 = vpack.c.bf16 0.0, %v683
      %s687 = ssub.s32 16, 1
      %688 = vst [vmem:[%s684] sm:%s687] %v685
      %s689 = scalar_lea.vmem %s212, 132
      %v690 = vld [vmem:[%s689] sm:$0xf]
      %v691 = vunpack.c.l.bf16 %v690
      %v692 = vunpack.c.h.bf16 %v690
      %v693 = vlaneseq
      %v694 = vshrl.u32 %v693, 7
      %v695 = vadd.s32 %v694, 64
      %vm696 = vcmp.lt.s32.totalorder %v695, 108
      %v697 = vsel %vm696, %v691, %v11
      %s698 = scalar_lea.vmem [#allocation7], 132
      %v699 = vpack.c.bf16 0.0, %v697
      %s701 = ssub.s32 16, 1
      %702 = vst [vmem:[%s698] sm:%s701] %v699
      %s703 = scalar_lea.vmem %s212, 136
      %v704 = vld [vmem:[%s703] sm:$0xf]
      %v705 = vunpack.c.l.bf16 %v704
      %v706 = vunpack.c.h.bf16 %v704
      %v707 = vlaneseq
      %v708 = vshrl.u32 %v707, 7
      %v709 = vadd.s32 %v708, 64
      %vm710 = vcmp.lt.s32.totalorder %v709, 108
      %v711 = vsel %vm710, %v705, %v11
      %s712 = scalar_lea.vmem [#allocation7], 136
      %v713 = vpack.c.bf16 0.0, %v711
      %s715 = ssub.s32 16, 1
      %716 = vst [vmem:[%s712] sm:%s715] %v713
      %s717 = scalar_lea.vmem %s212, 140
      %v718 = vld [vmem:[%s717] sm:$0xf]
      %v719 = vunpack.c.l.bf16 %v718
      %v720 = vunpack.c.h.bf16 %v718
      %v721 = vlaneseq
      %v722 = vshrl.u32 %v721, 7
      %v723 = vadd.s32 %v722, 64
      %vm724 = vcmp.lt.s32.totalorder %v723, 108
      %v725 = vsel %vm724, %v719, %v11
      %s726 = scalar_lea.vmem [#allocation7], 140
      %v727 = vpack.c.bf16 0.0, %v725
      %s729 = ssub.s32 16, 1
      %730 = vst [vmem:[%s726] sm:%s729] %v727
      %s731 = scalar_lea.vmem %s212, 144
      %v732 = vld [vmem:[%s731] sm:$0xf]
      %v733 = vunpack.c.l.bf16 %v732
      %v734 = vunpack.c.h.bf16 %v732
      %v735 = vlaneseq
      %v736 = vshrl.u32 %v735, 7
      %v737 = vadd.s32 %v736, 72
      %vm738 = vcmp.lt.s32.totalorder %v737, 108
      %v739 = vsel %vm738, %v733, %v11
      %s740 = scalar_lea.vmem [#allocation7], 144
      %v741 = vpack.c.bf16 0.0, %v739
      %s743 = ssub.s32 16, 1
      %744 = vst [vmem:[%s740] sm:%s743] %v741
      %s745 = scalar_lea.vmem %s212, 148
      %v746 = vld [vmem:[%s745] sm:$0xf]
      %v747 = vunpack.c.l.bf16 %v746
      %v748 = vunpack.c.h.bf16 %v746
      %v749 = vlaneseq
      %v750 = vshrl.u32 %v749, 7
      %v751 = vadd.s32 %v750, 72
      %vm752 = vcmp.lt.s32.totalorder %v751, 108
      %v753 = vsel %vm752, %v747, %v11
      %s754 = scalar_lea.vmem [#allocation7], 148
      %v755 = vpack.c.bf16 0.0, %v753
      %s757 = ssub.s32 16, 1
      %758 = vst [vmem:[%s754] sm:%s757] %v755
      %s759 = scalar_lea.vmem %s212, 152
      %v760 = vld [vmem:[%s759] sm:$0xf]
      %v761 = vunpack.c.l.bf16 %v760
      %v762 = vunpack.c.h.bf16 %v760
      %v763 = vlaneseq
      %v764 = vshrl.u32 %v763, 7
      %v765 = vadd.s32 %v764, 72
      %vm766 = vcmp.lt.s32.totalorder %v765, 108
      %v767 = vsel %vm766, %v761, %v11
      %s768 = scalar_lea.vmem [#allocation7], 152
      %v769 = vpack.c.bf16 0.0, %v767
      %s771 = ssub.s32 16, 1
      %772 = vst [vmem:[%s768] sm:%s771] %v769
      %s773 = scalar_lea.vmem %s212, 156
      %v774 = vld [vmem:[%s773] sm:$0xf]
      %v775 = vunpack.c.l.bf16 %v774
      %v776 = vunpack.c.h.bf16 %v774
      %v777 = vlaneseq
      %v778 = vshrl.u32 %v777, 7
      %v779 = vadd.s32 %v778, 72
      %vm780 = vcmp.lt.s32.totalorder %v779, 108
      %v781 = vsel %vm780, %v775, %v11
      %s782 = scalar_lea.vmem [#allocation7], 156
      %v783 = vpack.c.bf16 0.0, %v781
      %s785 = ssub.s32 16, 1
      %786 = vst [vmem:[%s782] sm:%s785] %v783
      %s787 = scalar_lea.vmem %s212, 160
      %v788 = vld [vmem:[%s787] sm:$0xf]
      %v789 = vunpack.c.l.bf16 %v788
      %v790 = vunpack.c.h.bf16 %v788
      %v791 = vlaneseq
      %v792 = vshrl.u32 %v791, 7
      %v793 = vadd.s32 %v792, 80
      %vm794 = vcmp.lt.s32.totalorder %v793, 108
      %v795 = vsel %vm794, %v789, %v11
      %s796 = scalar_lea.vmem [#allocation7], 160
      %v797 = vpack.c.bf16 0.0, %v795
      %s799 = ssub.s32 16, 1
      %800 = vst [vmem:[%s796] sm:%s799] %v797
      %s801 = scalar_lea.vmem %s212, 164
      %v802 = vld [vmem:[%s801] sm:$0xf]
      %v803 = vunpack.c.l.bf16 %v802
      %v804 = vunpack.c.h.bf16 %v802
      %v805 = vlaneseq
      %v806 = vshrl.u32 %v805, 7
      %v807 = vadd.s32 %v806, 80
      %vm808 = vcmp.lt.s32.totalorder %v807, 108
      %v809 = vsel %vm808, %v803, %v11
      %s810 = scalar_lea.vmem [#allocation7], 164
      %v811 = vpack.c.bf16 0.0, %v809
      %s813 = ssub.s32 16, 1
      %814 = vst [vmem:[%s810] sm:%s813] %v811
      %s815 = scalar_lea.vmem %s212, 168
      %v816 = vld [vmem:[%s815] sm:$0xf]
      %v817 = vunpack.c.l.bf16 %v816
      %v818 = vunpack.c.h.bf16 %v816
      %v819 = vlaneseq
      %v820 = vshrl.u32 %v819, 7
      %v821 = vadd.s32 %v820, 80
      %vm822 = vcmp.lt.s32.totalorder %v821, 108
      %v823 = vsel %vm822, %v817, %v11
      %s824 = scalar_lea.vmem [#allocation7], 168
      %v825 = vpack.c.bf16 0.0, %v823
      %s827 = ssub.s32 16, 1
      %828 = vst [vmem:[%s824] sm:%s827] %v825
      %s829 = scalar_lea.vmem %s212, 172
      %v830 = vld [vmem:[%s829] sm:$0xf]
      %v831 = vunpack.c.l.bf16 %v830
      %v832 = vunpack.c.h.bf16 %v830
      %v833 = vlaneseq
      %v834 = vshrl.u32 %v833, 7
      %v835 = vadd.s32 %v834, 80
      %vm836 = vcmp.lt.s32.totalorder %v835, 108
      %v837 = vsel %vm836, %v831, %v11
      %s838 = scalar_lea.vmem [#allocation7], 172
      %v839 = vpack.c.bf16 0.0, %v837
      %s841 = ssub.s32 16, 1
      %842 = vst [vmem:[%s838] sm:%s841] %v839
      %s843 = scalar_lea.vmem %s212, 176
      %v844 = vld [vmem:[%s843] sm:$0xf]
      %v845 = vunpack.c.l.bf16 %v844
      %v846 = vunpack.c.h.bf16 %v844
      %v847 = vlaneseq
      %v848 = vshrl.u32 %v847, 7
      %v849 = vadd.s32 %v848, 88
      %vm850 = vcmp.lt.s32.totalorder %v849, 108
      %v851 = vsel %vm850, %v845, %v11
      %s852 = scalar_lea.vmem [#allocation7], 176
      %v853 = vpack.c.bf16 0.0, %v851
      %s855 = ssub.s32 16, 1
      %856 = vst [vmem:[%s852] sm:%s855] %v853
      %s857 = scalar_lea.vmem %s212, 180
      %v858 = vld [vmem:[%s857] sm:$0xf]
      %v859 = vunpack.c.l.bf16 %v858
      %v860 = vunpack.c.h.bf16 %v858
      %v861 = vlaneseq
      %v862 = vshrl.u32 %v861, 7
      %v863 = vadd.s32 %v862, 88
      %vm864 = vcmp.lt.s32.totalorder %v863, 108
      %v865 = vsel %vm864, %v859, %v11
      %s866 = scalar_lea.vmem [#allocation7], 180
      %v867 = vpack.c.bf16 0.0, %v865
      %s869 = ssub.s32 16, 1
      %870 = vst [vmem:[%s866] sm:%s869] %v867
      %s871 = scalar_lea.vmem %s212, 184
      %v872 = vld [vmem:[%s871] sm:$0xf]
      %v873 = vunpack.c.l.bf16 %v872
      %v874 = vunpack.c.h.bf16 %v872
      %v875 = vlaneseq
      %v876 = vshrl.u32 %v875, 7
      %v877 = vadd.s32 %v876, 88
      %vm878 = vcmp.lt.s32.totalorder %v877, 108
      %v879 = vsel %vm878, %v873, %v11
      %s880 = scalar_lea.vmem [#allocation7], 184
      %v881 = vpack.c.bf16 0.0, %v879
      %s883 = ssub.s32 16, 1
      %884 = vst [vmem:[%s880] sm:%s883] %v881
      %s885 = scalar_lea.vmem %s212, 188
      %v886 = vld [vmem:[%s885] sm:$0xf]
      %v887 = vunpack.c.l.bf16 %v886
      %v888 = vunpack.c.h.bf16 %v886
      %v889 = vlaneseq
      %v890 = vshrl.u32 %v889, 7
      %v891 = vadd.s32 %v890, 88
      %vm892 = vcmp.lt.s32.totalorder %v891, 108
      %v893 = vsel %vm892, %v887, %v11
      %s894 = scalar_lea.vmem [#allocation7], 188
      %v895 = vpack.c.bf16 0.0, %v893
      %s897 = ssub.s32 16, 1
      %898 = vst [vmem:[%s894] sm:%s897] %v895
      %s899 = scalar_lea.vmem %s212, 192
      %v900 = vld [vmem:[%s899] sm:$0xf]
      %v901 = vunpack.c.l.bf16 %v900
      %v902 = vunpack.c.h.bf16 %v900
      %v903 = vlaneseq
      %v904 = vshrl.u32 %v903, 7
      %v905 = vadd.s32 %v904, 96
      %vm906 = vcmp.lt.s32.totalorder %v905, 108
      %v907 = vsel %vm906, %v901, %v11
      %s908 = scalar_lea.vmem [#allocation7], 192
      %v909 = vpack.c.bf16 0.0, %v907
      %s911 = ssub.s32 16, 1
      %912 = vst [vmem:[%s908] sm:%s911] %v909
      %s913 = scalar_lea.vmem %s212, 196
      %v914 = vld [vmem:[%s913] sm:$0xf]
      %v915 = vunpack.c.l.bf16 %v914
      %v916 = vunpack.c.h.bf16 %v914
      %v917 = vlaneseq
      %v918 = vshrl.u32 %v917, 7
      %v919 = vadd.s32 %v918, 96
      %vm920 = vcmp.lt.s32.totalorder %v919, 108
      %v921 = vsel %vm920, %v915, %v11
      %s922 = scalar_lea.vmem [#allocation7], 196
      %v923 = vpack.c.bf16 0.0, %v921
      %s925 = ssub.s32 16, 1
      %926 = vst [vmem:[%s922] sm:%s925] %v923
      %s927 = scalar_lea.vmem %s212, 200
      %v928 = vld [vmem:[%s927] sm:$0xf]
      %v929 = vunpack.c.l.bf16 %v928
      %v930 = vunpack.c.h.bf16 %v928
      %v931 = vlaneseq
      %v932 = vshrl.u32 %v931, 7
      %v933 = vadd.s32 %v932, 96
      %vm934 = vcmp.lt.s32.totalorder %v933, 108
      %v935 = vsel %vm934, %v929, %v11
      %s936 = scalar_lea.vmem [#allocation7], 200
      %v937 = vpack.c.bf16 0.0, %v935
      %s939 = ssub.s32 16, 1
      %940 = vst [vmem:[%s936] sm:%s939] %v937
      %s941 = scalar_lea.vmem %s212, 204
      %v942 = vld [vmem:[%s941] sm:$0xf]
      %v943 = vunpack.c.l.bf16 %v942
      %v944 = vunpack.c.h.bf16 %v942
      %v945 = vlaneseq
      %v946 = vshrl.u32 %v945, 7
      %v947 = vadd.s32 %v946, 96
      %vm948 = vcmp.lt.s32.totalorder %v947, 108
      %v949 = vsel %vm948, %v943, %v11
      %s950 = scalar_lea.vmem [#allocation7], 204
      %v951 = vpack.c.bf16 0.0, %v949
      %s953 = ssub.s32 16, 1
      %954 = vst [vmem:[%s950] sm:%s953] %v951
      %s955 = scalar_lea.vmem %s212, 208
      %s957 = sor.u32 255, 127
      %s958 = sand.u32 %s957, 85
      %s959 = sshrl.u32 %s958, 1
      %s960 = sor.u32 %s958, %s959
      %s961 = sand.u32 51, %s960
      %s962 = sshrl.u32 %s961, 2
      %s963 = sor.u32 %s961, %s962
      %s964 = sand.u32 15, %s963
      %v965 = vld [vmem:[%s955] sm:%s964]
      %v966 = vunpack.c.l.bf16 %v965
      %v967 = vunpack.c.h.bf16 %v965
      %v968 = vlaneseq
      %v969 = vshrl.u32 %v968, 7
      %v970 = vadd.s32 %v969, 104
      %vm971 = vcmp.lt.s32.totalorder %v970, 108
      %v972 = vsel %vm971, %v966, %v11
      %s973 = scalar_lea.vmem [#allocation7], 208
      %v974 = vpack.c.bf16 0.0, %v972
      %s976 = ssub.s32 16, 1
      %977 = vst [vmem:[%s973] sm:%s976] %v974
      %s978 = scalar_lea.vmem %s212, 212
      %s980 = sor.u32 255, 127
      %s981 = sand.u32 %s980, 85
      %s982 = sshrl.u32 %s981, 1
      %s983 = sor.u32 %s981, %s982
      %s984 = sand.u32 51, %s983
      %s985 = sshrl.u32 %s984, 2
      %s986 = sor.u32 %s984, %s985
      %s987 = sand.u32 15, %s986
      %v988 = vld [vmem:[%s978] sm:%s987]
      %v989 = vunpack.c.l.bf16 %v988
      %v990 = vunpack.c.h.bf16 %v988
      %v991 = vlaneseq
      %v992 = vshrl.u32 %v991, 7
      %v993 = vadd.s32 %v992, 104
      %vm994 = vcmp.lt.s32.totalorder %v993, 108
      %v995 = vsel %vm994, %v989, %v11
      %s996 = scalar_lea.vmem [#allocation7], 212
      %v997 = vpack.c.bf16 0.0, %v995
      %s999 = ssub.s32 16, 1
      %1000 = vst [vmem:[%s996] sm:%s999] %v997
      %s1001 = scalar_lea.vmem %s212, 216
      %s1003 = sor.u32 255, 127
      %s1004 = sand.u32 %s1003, 85
      %s1005 = sshrl.u32 %s1004, 1
      %s1006 = sor.u32 %s1004, %s1005
      %s1007 = sand.u32 51, %s1006
      %s1008 = sshrl.u32 %s1007, 2
      %s1009 = sor.u32 %s1007, %s1008
      %s1010 = sand.u32 15, %s1009
      %v1011 = vld [vmem:[%s1001] sm:%s1010]
      %v1012 = vunpack.c.l.bf16 %v1011
      %v1013 = vunpack.c.h.bf16 %v1011
      %v1014 = vlaneseq
      %v1015 = vshrl.u32 %v1014, 7
      %v1016 = vadd.s32 %v1015, 104
      %vm1017 = vcmp.lt.s32.totalorder %v1016, 108
      %v1018 = vsel %vm1017, %v1012, %v11
      %s1019 = scalar_lea.vmem [#allocation7], 216
      %v1020 = vpack.c.bf16 0.0, %v1018
      %s1022 = ssub.s32 16, 1
      %1023 = vst [vmem:[%s1019] sm:%s1022] %v1020
      %s1024 = scalar_lea.vmem %s212, 220
      %s1026 = sor.u32 255, 127
      %s1027 = sand.u32 %s1026, 85
      %s1028 = sshrl.u32 %s1027, 1
      %s1029 = sor.u32 %s1027, %s1028
      %s1030 = sand.u32 51, %s1029
      %s1031 = sshrl.u32 %s1030, 2
      %s1032 = sor.u32 %s1030, %s1031
      %s1033 = sand.u32 15, %s1032
      %v1034 = vld [vmem:[%s1024] sm:%s1033]
      %v1035 = vunpack.c.l.bf16 %v1034
      %v1036 = vunpack.c.h.bf16 %v1034
      %v1037 = vlaneseq
      %v1038 = vshrl.u32 %v1037, 7
      %v1039 = vadd.s32 %v1038, 104
      %vm1040 = vcmp.lt.s32.totalorder %v1039, 108
      %v1041 = vsel %vm1040, %v1035, %v11
      %s1042 = scalar_lea.vmem [#allocation7], 220
      %v1043 = vpack.c.bf16 0.0, %v1041
      %s1045 = ssub.s32 16, 1
      %1046 = vst [vmem:[%s1042] sm:%s1045] %v1043
      %v1048 = vld [vmem:[%s0] sm:$0xf]
      %v1049 = vld [vmem:[%s0 + $0x4] sm:$0xf]
      %v1050 = vld [vmem:[#allocation7] sm:$0xff]
      %v1051 = vld [vmem:[#allocation7 + $0x8] sm:$0xff]
      %v1052 = vld [vmem:[#allocation7 + $0x10] sm:$0xff]
      %v1053 = vld [vmem:[#allocation7 + $0x18] sm:$0xff]
      %v1054 = vld [vmem:[#allocation7 + $0x20] sm:$0xff]
      %v1055 = vld [vmem:[#allocation7 + $0x28] sm:$0xff]
      %v1056 = vld [vmem:[#allocation7 + $0x30] sm:$0xff]
      %v1057 = vld [vmem:[#allocation7 + $0x38] sm:$0xff]
      %v1058 = vld [vmem:[#allocation7 + $0x40] sm:$0xff]
      %v1059 = vld [vmem:[#allocation7 + $0x48] sm:$0xff]
      %v1060 = vld [vmem:[#allocation7 + $0x50] sm:$0xff]
      %v1061 = vld [vmem:[#allocation7 + $0x58] sm:$0xff]
      %v1062 = vld [vmem:[#allocation7 + $0x60] sm:$0xff]
      %v1063 = vld [vmem:[#allocation7 + $0x68] sm:$0xff]
      %v1064 = vld [vmem:[#allocation7 + $0x70] sm:$0xff]
      %v1065 = vld [vmem:[#allocation7 + $0x78] sm:$0xff]
      %v1066 = vld [vmem:[#allocation7 + $0x80] sm:$0xff]
      %v1067 = vld [vmem:[#allocation7 + $0x88] sm:$0xff]
      %v1068 = vld [vmem:[#allocation7 + $0x90] sm:$0xff]
      %v1069 = vld [vmem:[#allocation7 + $0x98] sm:$0xff]
      %v1070 = vld [vmem:[#allocation7 + $0xa0] sm:$0xff]
      %v1071 = vld [vmem:[#allocation7 + $0xa8] sm:$0xff]
      %v1072 = vld [vmem:[#allocation7 + $0xb0] sm:$0xff]
      %v1073 = vld [vmem:[#allocation7 + $0xb8] sm:$0xff]
      %v1074 = vld [vmem:[#allocation7 + $0xc0] sm:$0xff]
      %v1075 = vld [vmem:[#allocation7 + $0xc8] sm:$0xff]
      %v1076 = vld [vmem:[#allocation7 + $0xd0] sm:$0xff]
      %v1077 = vld [vmem:[#allocation7 + $0xd8] sm:$0xff]
      %v1080 = vunpack.c.l.b16 %v1048
      %v1081 = vunpack.c.l.b16 %v1049
      %v1082 = vpack.c.b16 %v1081, %v1080
      %v1111 = vunpack.c.l.b16 %v1050
      %v1112 = vunpack.c.h.b16 %v1050
      %v1113 = vunpack.c.l.b16 %v1051
      %v1114 = vunpack.c.h.b16 %v1051
      %v1115 = vunpack.c.l.b16 %v1052
      %v1116 = vunpack.c.h.b16 %v1052
      %v1117 = vunpack.c.l.b16 %v1053
      %v1118 = vunpack.c.h.b16 %v1053
      %v1119 = vunpack.c.l.b16 %v1054
      %v1120 = vunpack.c.h.b16 %v1054
      %v1121 = vunpack.c.l.b16 %v1055
      %v1122 = vunpack.c.h.b16 %v1055
      %v1123 = vunpack.c.l.b16 %v1056
      %v1124 = vunpack.c.h.b16 %v1056
      %v1125 = vunpack.c.l.b16 %v1057
      %v1126 = vunpack.c.h.b16 %v1057
      %v1127 = vunpack.c.l.b16 %v1058
      %v1128 = vunpack.c.h.b16 %v1058
      %v1129 = vunpack.c.l.b16 %v1059
      %v1130 = vunpack.c.h.b16 %v1059
      %v1131 = vunpack.c.l.b16 %v1060
      %v1132 = vunpack.c.h.b16 %v1060
      %v1133 = vunpack.c.l.b16 %v1061
      %v1134 = vunpack.c.h.b16 %v1061
      %v1135 = vunpack.c.l.b16 %v1062
      %v1136 = vunpack.c.h.b16 %v1062
      %v1137 = vunpack.c.l.b16 %v1063
      %v1138 = vunpack.c.h.b16 %v1063
      %v1139 = vunpack.c.l.b16 %v1064
      %v1140 = vunpack.c.h.b16 %v1064
      %v1141 = vunpack.c.l.b16 %v1065
      %v1142 = vunpack.c.h.b16 %v1065
      %v1143 = vunpack.c.l.b16 %v1066
      %v1144 = vunpack.c.h.b16 %v1066
      %v1145 = vunpack.c.l.b16 %v1067
      %v1146 = vunpack.c.h.b16 %v1067
      %v1147 = vunpack.c.l.b16 %v1068
      %v1148 = vunpack.c.h.b16 %v1068
      %v1149 = vunpack.c.l.b16 %v1069
      %v1150 = vunpack.c.h.b16 %v1069
      %v1151 = vunpack.c.l.b16 %v1070
      %v1152 = vunpack.c.h.b16 %v1070
      %v1153 = vunpack.c.l.b16 %v1071
      %v1154 = vunpack.c.h.b16 %v1071
      %v1155 = vunpack.c.l.b16 %v1072
      %v1156 = vunpack.c.h.b16 %v1072
      %v1157 = vunpack.c.l.b16 %v1073
      %v1158 = vunpack.c.h.b16 %v1073
      %v1159 = vunpack.c.l.b16 %v1074
      %v1160 = vunpack.c.h.b16 %v1074
      %v1161 = vunpack.c.l.b16 %v1075
      %v1162 = vunpack.c.h.b16 %v1075
      %v1163 = vunpack.c.l.b16 %v1076
      %v1164 = vunpack.c.h.b16 %v1076
      %v1165 = vunpack.c.l.b16 %v1077
      %v1166 = vunpack.c.h.b16 %v1077
      %v1167 = vpack.c.b16 %v1115, %v1111
      %v1168 = vpack.c.b16 %v1116, %v1112
      %v1169 = vpack.c.b16 %v1117, %v1113
      %v1170 = vpack.c.b16 %v1118, %v1114
      %v1171 = vpack.c.b16 %v1123, %v1119
      %v1172 = vpack.c.b16 %v1124, %v1120
      %v1173 = vpack.c.b16 %v1125, %v1121
      %v1174 = vpack.c.b16 %v1126, %v1122
      %v1175 = vpack.c.b16 %v1131, %v1127
      %v1176 = vpack.c.b16 %v1132, %v1128
      %v1177 = vpack.c.b16 %v1133, %v1129
      %v1178 = vpack.c.b16 %v1134, %v1130
      %v1179 = vpack.c.b16 %v1139, %v1135
      %v1180 = vpack.c.b16 %v1140, %v1136
      %v1181 = vpack.c.b16 %v1141, %v1137
      %v1182 = vpack.c.b16 %v1142, %v1138
      %v1183 = vpack.c.b16 %v1147, %v1143
      %v1184 = vpack.c.b16 %v1148, %v1144
      %v1185 = vpack.c.b16 %v1149, %v1145
      %v1186 = vpack.c.b16 %v1150, %v1146
      %v1187 = vpack.c.b16 %v1155, %v1151
      %v1188 = vpack.c.b16 %v1156, %v1152
      %v1189 = vpack.c.b16 %v1157, %v1153
      %v1190 = vpack.c.b16 %v1158, %v1154
      %v1191 = vpack.c.b16 %v1163, %v1159
      %v1192 = vpack.c.b16 %v1164, %v1160
      %v1193 = vpack.c.b16 %v1165, %v1161
      %v1194 = vpack.c.b16 %v1166, %v1162
      %vm1223 = vcmask 916480
      %v1225 = vsel %vm1223, %v1082, 0
      %1227 = vmatprep.subr.bf16.mxu0 0
      %1228 = vmatpush1.bf16.msra.mxu0 0
      %1229 = vmatprep.subr.bf16.mxu0 %v1192
      %1230 = vmatpush1.bf16.msra.mxu0 %v1191
      %1231 = vmatprep.subr.bf16.mxu0 %v1188
      %1232 = vmatpush1.bf16.msra.mxu0 %v1187
      %1233 = vmatprep.subr.bf16.mxu0 %v1184
      %1234 = vmatpush1.bf16.msra.mxu0 %v1183
      %1235 = vmatprep.subr.bf16.mxu0 %v1180
      %1236 = vmatpush1.bf16.msra.mxu0 %v1179
      %1237 = vmatprep.subr.bf16.mxu0 %v1176
      %1238 = vmatpush1.bf16.msra.mxu0 %v1175
      %1239 = vmatprep.subr.bf16.mxu0 %v1172
      %1240 = vmatpush1.bf16.msra.mxu0 %v1171
      %1241 = vmatprep.subr.bf16.mxu0 %v1168
      %1242 = vmatpush1.bf16.msra.mxu0 %v1167
      %1243 = vmatprep.subr.bf16.mxu0 0
      %1244 = vmatpush2.bf16.msra.mxu0 0
      %1245 = vmatprep.subr.bf16.mxu0 0
      %1246 = vmatpush2.bf16.msra.mxu0 0
      %1247 = vmatprep.subr.bf16.mxu0 0
      %1248 = vmatpush2.bf16.msra.mxu0 0
      %1249 = vmatprep.subr.bf16.mxu0 0
      %1250 = vmatpush2.bf16.msra.mxu0 0
      %1251 = vmatprep.subr.bf16.mxu0 0
      %1252 = vmatpush2.bf16.msra.mxu0 0
      %1253 = vmatprep.subr.bf16.mxu0 0
      %1254 = vmatpush2.bf16.msra.mxu0 0
      %1255 = vmatprep.subr.bf16.mxu0 0
      %1256 = vmatpush2.bf16.msra.mxu0 0
      %1257 = vmatprep.subr.bf16.mxu0 0
      %1258 = vmatpush2.bf16.msra.mxu0 0
      %1259 = vmatprep.mubr.bf16.mxu0 0
      %1260 = vmatmul.mubr.bf16.gmra.mxu0 %v1225
      %v1261 = vpop.f32.mrf.mxu0
      %v1262 = vadd.f32 0.0, %v1261
      %v1263 = vpop.f32.mrf.mxu0
      %v1264 = vadd.f32 0.0, %v1263
      %v1265 = vpop.f32.mrf.mxu0
      %v1266 = vadd.f32 0.0, %v1265
      %v1267 = vpop.f32.mrf.mxu0
      %v1268 = vadd.f32 0.0, %v1267
      %1269 = vdwg.mxu0
      %1270 = vmatprep.subr.bf16.mxu0 0
      %1271 = vmatpush1.bf16.msra.mxu0 0
      %1272 = vmatprep.subr.bf16.mxu0 %v1194
      %1273 = vmatpush1.bf16.msra.mxu0 %v1193
      %1274 = vmatprep.subr.bf16.mxu0 %v1190
      %1275 = vmatpush1.bf16.msra.mxu0 %v1189
      %1276 = vmatprep.subr.bf16.mxu0 %v1186
      %1277 = vmatpush1.bf16.msra.mxu0 %v1185
      %1278 = vmatprep.subr.bf16.mxu0 %v1182
      %1279 = vmatpush1.bf16.msra.mxu0 %v1181
      %1280 = vmatprep.subr.bf16.mxu0 %v1178
      %1281 = vmatpush1.bf16.msra.mxu0 %v1177
      %1282 = vmatprep.subr.bf16.mxu0 %v1174
      %1283 = vmatpush1.bf16.msra.mxu0 %v1173
      %1284 = vmatprep.subr.bf16.mxu0 %v1170
      %1285 = vmatpush1.bf16.msra.mxu0 %v1169
      %1286 = vmatprep.subr.bf16.mxu0 0
      %1287 = vmatpush2.bf16.msra.mxu0 0
      %1288 = vmatprep.subr.bf16.mxu0 0
      %1289 = vmatpush2.bf16.msra.mxu0 0
      %1290 = vmatprep.subr.bf16.mxu0 0
      %1291 = vmatpush2.bf16.msra.mxu0 0
      %1292 = vmatprep.subr.bf16.mxu0 0
      %1293 = vmatpush2.bf16.msra.mxu0 0
      %1294 = vmatprep.subr.bf16.mxu0 0
      %1295 = vmatpush2.bf16.msra.mxu0 0
      %1296 = vmatprep.subr.bf16.mxu0 0
      %1297 = vmatpush2.bf16.msra.mxu0 0
      %1298 = vmatprep.subr.bf16.mxu0 0
      %1299 = vmatpush2.bf16.msra.mxu0 0
      %1300 = vmatprep.subr.bf16.mxu0 0
      %1301 = vmatpush2.bf16.msra.mxu0 0
      %1302 = vmatprep.mubr.bf16.mxu0 0
      %1303 = vmatmul.mubr.bf16.gmra.mxu0 %v1225
      %v1304 = vpop.f32.mrf.mxu0
      %v1305 = vadd.f32 0.0, %v1304
      %v1306 = vpop.f32.mrf.mxu0
      %v1307 = vadd.f32 0.0, %v1306
      %v1308 = vpop.f32.mrf.mxu0
      %v1309 = vadd.f32 0.0, %v1308
      %v1310 = vpop.f32.mrf.mxu0
      %v1311 = vadd.f32 0.0, %v1310
      %1312 = vdwg.mxu0
      %v1313 = vpack.c.bf16 %v1266, %v1262
      %v1314 = vpack.c.bf16 %v1268, %v1264
      %v1315 = vpack.c.bf16 %v1309, %v1305
      %v1316 = vpack.c.bf16 %v1311, %v1307
      %v1321 = vunpack.c.l.b16 %v1313
      %v1322 = vunpack.c.l.b16 %v1314
      %v1323 = vunpack.c.l.b16 %v1315
      %v1324 = vunpack.c.l.b16 %v1316
      %v1325 = vunpack.c.h.b16 %v1313
      %v1326 = vunpack.c.h.b16 %v1314
      %v1327 = vunpack.c.h.b16 %v1315
      %v1328 = vunpack.c.h.b16 %v1316
      %v1329 = vpack.c.b16 %v1322, %v1321
      %v1330 = vpack.c.b16 %v1324, %v1323
      %v1331 = vpack.c.b16 %v1326, %v1325
      %v1332 = vpack.c.b16 %v1328, %v1327
      %1337 = vst [vmem:[%s222] sm:$0xff] %v1329
      %1338 = vst [vmem:[%s222 + $0x8] sm:$0xff] %v1330
      %1339 = vst [vmem:[%s222 + $0x10] sm:$0xff] %v1331
      %1340 = vst [vmem:[%s222 + $0x18] sm:$0xff] %v1332
      %v1341 = vadd.f32 %v1262, %v1264
      %v1342 = vadd.f32 %v1341, %v1305
      %v1343 = vadd.f32 %v1342, %v1307
      %1344 = vadd.xlane.f32.xlu0 %v1343
      %v1345 = vpop.xlane.xlu0 %1344
      %v1346 = vadd.f32 %v1266, %v1268
      %v1347 = vadd.f32 %v1346, %v1309
      %v1348 = vadd.f32 %v1347, %v1311
      %1349 = vadd.xlane.f32.xlu0 %v1348
      %v1350 = vpop.xlane.xlu0 %1349
      %v1351 = vmul.f32 %v1262, %v1262
      %v1352 = vmul.f32 %v1264, %v1264
      %v1353 = vmul.f32 %v1305, %v1305
      %v1354 = vmul.f32 %v1307, %v1307
      %v1355 = vmul.f32 %v1266, %v1266
      %v1356 = vmul.f32 %v1268, %v1268
      %v1357 = vmul.f32 %v1309, %v1309
      %v1358 = vmul.f32 %v1311, %v1311
      %v1359 = vadd.f32 %v1351, %v1352
      %v1360 = vadd.f32 %v1359, %v1353
      %v1361 = vadd.f32 %v1360, %v1354
      %1362 = vadd.xlane.f32.xlu0 %v1361
      %v1363 = vpop.xlane.xlu0 %1362
      %v1364 = vadd.f32 %v1355, %v1356
      %v1365 = vadd.f32 %v1364, %v1357
      %v1366 = vadd.f32 %v1365, %v1358
      %1367 = vadd.xlane.f32.xlu0 %v1366
      %v1368 = vpop.xlane.xlu0 %1367
      %vm1369 = vcmask 7168
      %v1370 = vsel %vm1369, %v1345, %v1363
      %v1371 = vsel %vm1369, %v1350, %v1368
      %p1372 = scmp.eq.s32.totalorder %s26, 0
      // Predicated region
      $region29: #{basic_block_forward.4} parent=27 // pred_check
        %p1373 = pneg %p1372
      $region30: #{basic_block_forward.4} parent=27 // pred_check_branch
        %1375 = sbr.rel (%p1373) target = $region32
      $region31: #{basic_block_forward.4} parent=27 // pred_region
        %vm1376 = vcmask 15360
        %1377 = vst.msk [vmem:[%s228] sm:$0xff] %vm1376, %v1370
        %1378 = vst.msk [vmem:[%s228 + $0x8] sm:$0xff] %vm1376, %v1371
      $region32: #{basic_block_forward.4} parent=27 // pred_fallthru
        _
      %p1379 = scmp.gt.s32.totalorder %s26, 0
      // Predicated region
      $region33: #{basic_block_forward.4} parent=27 // pred_check
        %p1380 = pneg %p1379
      $region34: #{basic_block_forward.4} parent=27 // pred_check_branch
        %1382 = sbr.rel (%p1380) target = $region36
      $region35: #{basic_block_forward.4} parent=27 // pred_region
        %v1383 = vld [vmem:[%s228] sm:$0xff]
        %v1384 = vld [vmem:[%s228 + $0x8] sm:$0xff]
        %v1385 = vadd.f32 %v1383, %v1370
        %v1386 = vadd.f32 %v1384, %v1371
        %vm1387 = vcmask 15360
        %1388 = vst.msk [vmem:[%s228] sm:$0xff] %vm1387, %v1385
        %1389 = vst.msk [vmem:[%s228 + $0x8] sm:$0xff] %vm1387, %v1386
      $region36: #{basic_block_forward.4} parent=27 // pred_fallthru
        _
      %s1390 = smul.u32 4, %s26
      %p1391 = scmp.lt.s32.totalorder %s25, 1
      %s1392 = scalar_select %p1391, %s25, 1
      %p1393 = scmp.lt.s32.totalorder %s1390, 3
      %s1394 = scalar_select %p1393, %s1390, 3
      %s1395 = smul.addr %s1392, 8
      %s1396 = sadd.s32 %s1394, %s1395
      %s1397 = smul.addr %s1396, 4
      %s1398 = scalar_lea.vmem %s3, %s1397
      %p1399 = scmp.lt.s32.totalorder %s25, 1
      %s1400 = scalar_select %p1399, %s25, 1
      %s1401 = smul.addr %s1400, 2
      %s1402 = smul.addr %s1401, 8
      %s1403 = scalar_lea.vmem %s4, %s1402
      // Predicated region
      $region37: #{basic_block_forward.4} parent=27 // pred_check
        %p1404 = pneg %p102
      $region38: #{basic_block_forward.4} parent=27 // pred_check_branch
        %1406 = sbr.rel (%p1404) target = $region40
      $region39: #{basic_block_forward.4} parent=27 // pred_region
        %s1407 = smul.u32 4, %s26
      $region40: #{basic_block_forward.4} parent=27 // pred_fallthru
        _
      // Predicated region
      $region41: #{basic_block_forward.4} parent=27 // pred_check
        %p1408 = pneg %p128
      $region42: #{basic_block_forward.4} parent=27 // pred_check_branch
        %1410 = sbr.rel (%p1408) target = $region44
      $region43: #{basic_block_forward.4} parent=27 // pred_region
        _
      $region44: #{basic_block_forward.4} parent=27 // pred_fallthru
        _
    $region28: #{basic_block_forward.4} parent=5 // pred_fallthru
      _
    %p1411 = scmp.le.s32.totalorder 2, %s16
    // Predicated region
    $region45: #{basic_block_forward.4} parent=5 // pred_check
      %p1412 = pneg %p1411
    $region46: #{basic_block_forward.4} parent=5 // pred_check_branch
      %1414 = sbr.rel (%p1412) target = $region48
    $region47: #{basic_block_forward.4} parent=5 // pred_region
      %s1415 = ssub.s32 %s16, 2
      // Predicated region
      $region49: #{basic_block_forward.4} parent=47 // pred_check
        %p1416 = pneg %p108
      $region50: #{basic_block_forward.4} parent=47 // pred_check_branch
        %1418 = sbr.rel (%p1416) target = $region52
      $region51: #{basic_block_forward.4} parent=47 // pred_region
        %s1419 = smul.u32 4, %s28
        %p1420 = scmp.lt.s32.totalorder %s27, 1
        %s1421 = scalar_select %p1420, %s27, 1
        %p1422 = scmp.lt.s32.totalorder %s1419, 3
        %s1423 = scalar_select %p1422, %s1419, 3
        %s1424 = smul.addr %s1421, 8
        %s1425 = sadd.s32 %s1423, %s1424
        %s1426 = smul.addr %s1425, 4
        %s1427 = scalar_lea.vmem %s3, %s1426
      $region52: #{basic_block_forward.4} parent=47 // pred_fallthru
        _
      // Predicated region
      $region53: #{basic_block_forward.4} parent=47 // pred_check
        %p1428 = pneg %p134
      $region54: #{basic_block_forward.4} parent=47 // pred_check_branch
        %1430 = sbr.rel (%p1428) target = $region56
      $region55: #{basic_block_forward.4} parent=47 // pred_region
        %p1431 = scmp.lt.s32.totalorder %s27, 1
        %s1432 = scalar_select %p1431, %s27, 1
        %s1433 = smul.addr %s1432, 2
        %s1434 = smul.addr %s1433, 8
        %s1435 = scalar_lea.vmem %s4, %s1434
      $region56: #{basic_block_forward.4} parent=47 // pred_fallthru
        _
    $region48: #{basic_block_forward.4} parent=5 // pred_fallthru
      _
  $region6: #{basic_block_forward.4} parent=0 // loop_footer
    %s20 = sadd.s32 1, %s16
  $region7: #{basic_block_forward.4} parent=0 // loop_footer_branch
    %15 = sbr.rel target = $region3
  $region8: #{basic_block_forward.4} parent=0 // loop_exit
    _

// kernel: basic_block_forward.3
$region0: #{basic_block_forward.3}
  #allocation0 [shape = 'u32[]', space=smem, size = 0x4, offset = 0x4, fixed_abs, tag = 'smem constant byte address 0x4 - core index']
  #allocation1 [shape = 'u32[144,128]{1,0:T(1,128)}', space=vmem, size = 0x12000, scoped, tag = 'internal scratch']
  %s0 = inlined_call_operand.vmem [shape: f32[16,1], index: 0, kind: input, shape index: {}]
  %s1 = inlined_call_operand.vmem [shape: f32[16,1], index: 1, kind: input, shape index: {}]
  %s2 = inlined_call_operand.vmem [shape: bf16[2,16,512], index: 2, kind: input, shape index: {}]
  %s3 = inlined_call_operand.vmem [shape: f32[2,16,512], index: 3, kind: output, shape index: {}]
  %s4 = sld [smem:[#allocation0]]
  $region45: #{basic_block_forward.3} parent=0
    _
  %s6 = ssub.s32 1, %s4
  %s7 = scalar_select 0, %s6, %s4
  loop: start=0, step=1, limit=4
  $region2: #{basic_block_forward.3} parent=0 // loop_pre_header
    _
  $region3: #{basic_block_forward.3} parent=0 // loop_header
    %s9 = sphi 0, %s13
    %p10 = scmp.ge.s32.totalorder %s9, 4
    %s16 = sphi 0, %s28
    %s17 = sphi 0, %s24
    %s18 = sphi 0, %s16
    %s19 = sphi 0, %s17
    %s20 = sphi 0, %s18
    %s21 = sphi 0, %s19
    %s29 = sphi 0, %s29
    %s31 = sphi 0, %s29
    %s32 = sphi 0, %s31
    %s46 = sphi 0, %s32
    %s50 = sphi 0, %s50
    %s52 = sphi 0, %s50
    %s53 = sphi 0, %s52
    %s67 = sphi 0, %s53
    %s75 = sphi 0, %s77
    %s78 = sphi 0, %s75
    %s79 = sphi 0, %s78
    %s95 = sphi 0, %s79
    %s103 = sphi 0, %s105
    %s106 = sphi 0, %s103
    %s107 = sphi 0, %s106
    %s123 = sphi 0, %s107
  $region4: #{basic_block_forward.3} parent=0 // loop_header_branch
    %12 = sbr.rel (%p10) target = $region8
  $region5: #{basic_block_forward.3} parent=0 // loop_body
    %s14 = ssub.s32 %s9, 1
    %s15 = ssub.s32 %s9, 2
    %s22 = sadd.s32 1, %s17
    %p23 = scmp.ge.s32.totalorder %s22, 1
    %s24 = scalar_select %p23, 0, %s22
    %s25 = sadd.s32 1, %s16
    %s26 = scalar_select %p23, %s25, %s16
    %p27 = scmp.ge.s32.totalorder %s26, 2
    %s28 = scalar_select %p27, 0, %s26
    %s30 = sadd.s32 %s29, 1
    %p33 = scmp.eq.s32.totalorder %s9, 1
    %p34 = scmp.ne.s32.totalorder %s29, %s31
    %p35 = scmp.eq.s32.totalorder %s9, 0
    %p36 = por %p34, %p35
    %p37 = scmp.ne.s32.totalorder %s29, %s31
    %p38 = scmp.eq.s32.totalorder %s14, 1
    %p39 = por %p37, %p38
    %p40 = scmp.ne.s32.totalorder %s31, %s32
    %p41 = scmp.eq.s32.totalorder %s14, 0
    %p42 = por %p40, %p41
    %p43 = scmp.ne.s32.totalorder %s31, %s32
    %p44 = scmp.eq.s32.totalorder %s15, 1
    %p45 = por %p43, %p44
    %p47 = scmp.ne.s32.totalorder %s32, %s46
    %p48 = scmp.eq.s32.totalorder %s15, 0
    %p49 = por %p47, %p48
    %s51 = sadd.s32 %s50, 1
    %p54 = scmp.eq.s32.totalorder %s9, 1
    %p55 = scmp.ne.s32.totalorder %s50, %s52
    %p56 = scmp.eq.s32.totalorder %s9, 0
    %p57 = por %p55, %p56
    %p58 = scmp.ne.s32.totalorder %s50, %s52
    %p59 = scmp.eq.s32.totalorder %s14, 1
    %p60 = por %p58, %p59
    %p61 = scmp.ne.s32.totalorder %s52, %s53
    %p62 = scmp.eq.s32.totalorder %s14, 0
    %p63 = por %p61, %p62
    %p64 = scmp.ne.s32.totalorder %s52, %s53
    %p65 = scmp.eq.s32.totalorder %s15, 1
    %p66 = por %p64, %p65
    %p68 = scmp.ne.s32.totalorder %s53, %s67
    %p69 = scmp.eq.s32.totalorder %s15, 0
    %p70 = por %p68, %p69
    %s71 = ssub.s32 %s16, %s28
    %s72 = ssub.s32 %s17, %s24
    %s73 = sor.u32 %s71, %s72
    %p74 = scmp.eq.s32.totalorder %s73, 0
    %s76 = sadd.s32 %s75, 1
    %s77 = scalar_select %p74, %s75, %s76
    %p80 = pneg %p74
    %p81 = scmp.eq.s32.totalorder %s9, 1
    %p82 = por %p80, %p81
    %p83 = scmp.ne.s32.totalorder %s75, %s78
    %p84 = scmp.eq.s32.totalorder %s9, 0
    %p85 = por %p83, %p84
    %p86 = scmp.ne.s32.totalorder %s75, %s78
    %p87 = scmp.eq.s32.totalorder %s14, 1
    %p88 = por %p86, %p87
    %p89 = scmp.ne.s32.totalorder %s78, %s79
    %p90 = scmp.eq.s32.totalorder %s14, 0
    %p91 = por %p89, %p90
    %p92 = scmp.ne.s32.totalorder %s78, %s79
    %p93 = scmp.eq.s32.totalorder %s15, 1
    %p94 = por %p92, %p93
    %p96 = scmp.ne.s32.totalorder %s79, %s95
    %p97 = scmp.eq.s32.totalorder %s15, 0
    %p98 = por %p96, %p97
    %s99 = ssub.s32 %s16, %s28
    %s100 = ssub.s32 %s17, %s24
    %s101 = sor.u32 %s99, %s100
    %p102 = scmp.eq.s32.totalorder %s101, 0
    %s104 = sadd.s32 %s103, 1
    %s105 = scalar_select %p102, %s103, %s104
    %p108 = pneg %p102
    %p109 = scmp.eq.s32.totalorder %s9, 1
    %p110 = por %p108, %p109
    %p111 = scmp.ne.s32.totalorder %s103, %s106
    %p112 = scmp.eq.s32.totalorder %s9, 0
    %p113 = por %p111, %p112
    %p114 = scmp.ne.s32.totalorder %s103, %s106
    %p115 = scmp.eq.s32.totalorder %s14, 1
    %p116 = por %p114, %p115
    %p117 = scmp.ne.s32.totalorder %s106, %s107
    %p118 = scmp.eq.s32.totalorder %s14, 0
    %p119 = por %p117, %p118
    %p120 = scmp.ne.s32.totalorder %s106, %s107
    %p121 = scmp.eq.s32.totalorder %s15, 1
    %p122 = por %p120, %p121
    %p124 = scmp.ne.s32.totalorder %s107, %s123
    %p125 = scmp.eq.s32.totalorder %s15, 0
    %p126 = por %p124, %p125
    %p127 = scmp.le.s32.totalorder 1, %s9
    %p128 = scmp.lt.s32.totalorder %s9, 3
    %p129 = pnand %p127, %p128
    %p130 = pneg %p129
    // Predicated region
    $region9: #{basic_block_forward.3} parent=5 // pred_check
      _
    $region10: #{basic_block_forward.3} parent=5 // pred_check_branch
      %132 = sbr.rel (%p129) target = $region12
    $region11: #{basic_block_forward.3} parent=5 // pred_region
      %s133 = ssub.s32 %s9, 1
      // Predicated region
      $region13: #{basic_block_forward.3} parent=11 // pred_check
        %p134 = pneg %p42
      $region14: #{basic_block_forward.3} parent=11 // pred_check_branch
        %136 = sbr.rel (%p134) target = $region16
      $region15: #{basic_block_forward.3} parent=11 // pred_region
        _
      $region16: #{basic_block_forward.3} parent=11 // pred_fallthru
        _
      // Predicated region
      $region17: #{basic_block_forward.3} parent=11 // pred_check
        %p137 = pneg %p63
      $region18: #{basic_block_forward.3} parent=11 // pred_check_branch
        %139 = sbr.rel (%p137) target = $region20
      $region19: #{basic_block_forward.3} parent=11 // pred_region
        _
      $region20: #{basic_block_forward.3} parent=11 // pred_fallthru
        _
    $region12: #{basic_block_forward.3} parent=5 // pred_fallthru
      _
    %p140 = scmp.lt.s32.totalorder %s9, 2
    // Predicated region
    $region21: #{basic_block_forward.3} parent=5 // pred_check
      %p141 = pneg %p140
    $region22: #{basic_block_forward.3} parent=5 // pred_check_branch
      %143 = sbr.rel (%p141) target = $region24
    $region23: #{basic_block_forward.3} parent=5 // pred_region
      // Predicated region
      $region25: #{basic_block_forward.3} parent=23 // pred_check
        %p144 = pneg %p85
      $region26: #{basic_block_forward.3} parent=23 // pred_check_branch
        %146 = sbr.rel (%p144) target = $region28
      $region27: #{basic_block_forward.3} parent=23 // pred_region
        %s147 = smul.u32 4, %s17
        %p148 = scmp.lt.s32.totalorder %s16, 1
        %s149 = scalar_select %p148, %s16, 1
        %p150 = scmp.lt.s32.totalorder %s147, 3
        %s151 = scalar_select %p150, %s147, 3
        %s152 = smul.addr %s149, 8
        %s153 = sadd.s32 %s151, %s152
        %s154 = smul.addr %s153, 4
        %s155 = scalar_lea.vmem %s2, %s154
        %s156 = smul.u32 4, %s17
      $region28: #{basic_block_forward.3} parent=23 // pred_fallthru
        _
    $region24: #{basic_block_forward.3} parent=5 // pred_fallthru
      _
    %p157 = scmp.le.s32.totalorder 1, %s9
    %p158 = scmp.lt.s32.totalorder %s9, 3
    %p159 = pnand %p157, %p158
    %p160 = pneg %p159
    // Predicated region
    $region29: #{basic_block_forward.3} parent=5 // pred_check
      _
    $region30: #{basic_block_forward.3} parent=5 // pred_check_branch
      %162 = sbr.rel (%p159) target = $region32
    $region31: #{basic_block_forward.3} parent=5 // pred_region
      %s163 = ssub.s32 %s9, 1
      %p164 = pneg %p42
      %p165 = pneg %p39
      %p166 = pneg %p63
      %p167 = pneg %p60
      %s168 = smul.u32 4, %s19
      %p169 = scmp.lt.s32.totalorder %s18, 1
      %s170 = scalar_select %p169, %s18, 1
      %p171 = scmp.lt.s32.totalorder %s168, 3
      %s172 = scalar_select %p171, %s168, 3
      %s173 = smul.addr %s170, 8
      %s174 = sadd.s32 %s172, %s173
      %s175 = smul.addr %s174, 4
      %s176 = scalar_lea.vmem %s2, %s175
      %p177 = pneg %p91
      %p178 = pneg %p88
      %p179 = pneg %p119
      %p180 = pneg %p116
      %s181 = smul.u32 4, %s19
      %p182 = scmp.lt.s32.totalorder %s18, 1
      %s183 = scalar_select %p182, %s18, 1
      %p184 = scmp.lt.s32.totalorder %s181, 3
      %s185 = scalar_select %p184, %s181, 3
      %s186 = smul.addr %s183, 8
      %s187 = sadd.s32 %s185, %s186
      %s188 = smul.addr %s187, 8
      %s189 = scalar_lea.vmem %s3, %s188
      %s190 = smul.u32 4, %s19
      %p191 = scmp.lt.s32.totalorder %s18, 1
      %s192 = scalar_select %p191, %s18, 1
      %p193 = scmp.lt.s32.totalorder %s190, 3
      %s194 = scalar_select %p193, %s190, 3
      %s195 = smul.addr %s192, 8
      %s196 = sadd.s32 %s194, %s195
      %s197 = smul.addr %s196, 4
      %s198 = scalar_lea.vmem %s2, %s197
      %s199 = smul.u32 4, %s19
      %s200 = smul.u32 4, %s19
      %p201 = scmp.lt.s32.totalorder %s18, 1
      %s202 = scalar_select %p201, %s18, 1
      %p203 = scmp.lt.s32.totalorder %s200, 3
      %s204 = scalar_select %p203, %s200, 3
      %s205 = smul.addr %s202, 8
      %s206 = sadd.s32 %s204, %s205
      %s207 = smul.addr %s206, 8
      %s208 = scalar_lea.vmem %s3, %s207
      %s209 = smul.u32 4, %s19
      %v210 = vld [vmem:[%s198] sm:$0xff]
      %v211 = vld [vmem:[%s198 + $0x8] sm:$0xff]
      %v212 = vld [vmem:[%s198 + $0x10] sm:$0xff]
      %v213 = vld [vmem:[%s198 + $0x18] sm:$0xff]
      %v214 = vunpack.c.l.bf16 %v210
      %v215 = vunpack.c.h.bf16 %v210
      %v216 = vunpack.c.l.bf16 %v211
      %v217 = vunpack.c.h.bf16 %v211
      %v218 = vunpack.c.l.bf16 %v212
      %v219 = vunpack.c.h.bf16 %v212
      %v220 = vunpack.c.l.bf16 %v213
      %v221 = vunpack.c.h.bf16 %v213
      %v222 = vld [vmem:[%s0] sm:$0xff]
      %v223 = vld [vmem:[%s0 + $0x8] sm:$0xff]
      %225 = vset.pattern.permute.xlu0 0
      %226 = vperm.xlu0 %225, %v222
      %v227 = vpop.permute.xlu0 %226
      %230 = vset.pattern.permute.xlu0 0
      %231 = vperm.xlu0 %230, %v223
      %v232 = vpop.permute.xlu0 %231
      %v234 = vmul.f32 %v214, %v227
      %v235 = vmul.f32 %v215, %v227
      %v236 = vmul.f32 %v216, %v227
      %v237 = vmul.f32 %v217, %v227
      %v238 = vmul.f32 %v218, %v232
      %v239 = vmul.f32 %v219, %v232
      %v240 = vmul.f32 %v220, %v232
      %v241 = vmul.f32 %v221, %v232
      %v242 = vld [vmem:[%s1] sm:$0xff]
      %v243 = vld [vmem:[%s1 + $0x8] sm:$0xff]
      %245 = vset.pattern.permute.xlu0 0
      %246 = vperm.xlu0 %245, %v242
      %v247 = vpop.permute.xlu0 %246
      %250 = vset.pattern.permute.xlu0 0
      %251 = vperm.xlu0 %250, %v243
      %v252 = vpop.permute.xlu0 %251
      %v254 = vadd.f32 %v234, %v247
      %v255 = vadd.f32 %v235, %v247
      %v256 = vadd.f32 %v236, %v247
      %v257 = vadd.f32 %v237, %v247
      %v258 = vadd.f32 %v238, %v252
      %v259 = vadd.f32 %v239, %v252
      %v260 = vadd.f32 %v240, %v252
      %v261 = vadd.f32 %v241, %v252
      %v262 = vmax.f32 %v254, 0.0
      %v263 = vmax.f32 %v255, 0.0
      %v264 = vmax.f32 %v256, 0.0
      %v265 = vmax.f32 %v257, 0.0
      %v266 = vmax.f32 %v258, 0.0
      %v267 = vmax.f32 %v259, 0.0
      %v268 = vmax.f32 %v260, 0.0
      %v269 = vmax.f32 %v261, 0.0
      %270 = vst [vmem:[%s208] sm:$0xff] %v262
      %271 = vst [vmem:[%s208 + $0x8] sm:$0xff] %v263
      %272 = vst [vmem:[%s208 + $0x10] sm:$0xff] %v264
      %273 = vst [vmem:[%s208 + $0x18] sm:$0xff] %v265
      %274 = vst [vmem:[%s208 + $0x20] sm:$0xff] %v266
      %275 = vst [vmem:[%s208 + $0x28] sm:$0xff] %v267
      %276 = vst [vmem:[%s208 + $0x30] sm:$0xff] %v268
      %277 = vst [vmem:[%s208 + $0x38] sm:$0xff] %v269
      %s278 = smul.u32 4, %s19
      %p279 = scmp.lt.s32.totalorder %s18, 1
      %s280 = scalar_select %p279, %s18, 1
      %p281 = scmp.lt.s32.totalorder %s278, 3
      %s282 = scalar_select %p281, %s278, 3
      %s283 = smul.addr %s280, 8
      %s284 = sadd.s32 %s282, %s283
      %s285 = smul.addr %s284, 8
      %s286 = scalar_lea.vmem %s3, %s285
      // Predicated region
      $region33: #{basic_block_forward.3} parent=31 // pred_check
        %p287 = pneg %p116
      $region34: #{basic_block_forward.3} parent=31 // pred_check_branch
        %289 = sbr.rel (%p287) target = $region36
      $region35: #{basic_block_forward.3} parent=31 // pred_region
        %s290 = smul.u32 4, %s19
      $region36: #{basic_block_forward.3} parent=31 // pred_fallthru
        _
    $region32: #{basic_block_forward.3} parent=5 // pred_fallthru
      _
    %p291 = scmp.le.s32.totalorder 2, %s9
    // Predicated region
    $region37: #{basic_block_forward.3} parent=5 // pred_check
      %p292 = pneg %p291
    $region38: #{basic_block_forward.3} parent=5 // pred_check_branch
      %294 = sbr.rel (%p292) target = $region40
    $region39: #{basic_block_forward.3} parent=5 // pred_region
      %s295 = ssub.s32 %s9, 2
      // Predicated region
      $region41: #{basic_block_forward.3} parent=39 // pred_check
        %p296 = pneg %p122
      $region42: #{basic_block_forward.3} parent=39 // pred_check_branch
        %298 = sbr.rel (%p296) target = $region44
      $region43: #{basic_block_forward.3} parent=39 // pred_region
        %s299 = smul.u32 4, %s21
        %p300 = scmp.lt.s32.totalorder %s20, 1
        %s301 = scalar_select %p300, %s20, 1
        %p302 = scmp.lt.s32.totalorder %s299, 3
        %s303 = scalar_select %p302, %s299, 3
        %s304 = smul.addr %s301, 8
        %s305 = sadd.s32 %s303, %s304
        %s306 = smul.addr %s305, 8
        %s307 = scalar_lea.vmem %s3, %s306
      $region44: #{basic_block_forward.3} parent=39 // pred_fallthru
        _
    $region40: #{basic_block_forward.3} parent=5 // pred_fallthru
      _
  $region6: #{basic_block_forward.3} parent=0 // loop_footer
    %s13 = sadd.s32 1, %s9
  $region7: #{basic_block_forward.3} parent=0 // loop_footer_branch
    %8 = sbr.rel target = $region3
  $region8: #{basic_block_forward.3} parent=0 // loop_exit
    _

</llo_original>
